<compile_context>
chip_gen: v7x
topology: tpu7x:2x2x1
jax: 0.10.0
libtpu: 0.0.40
codegen_flags: <defaults>
</compile_context>

<pallas_src>
import functools
import math

import jax
import jax.numpy as jnp
from jax.experimental import pallas as pl
from jax.experimental.pallas import tpu as pltpu

EPS = 1e-5


def _fold_bn(gamma, beta, mean, var, eps=EPS):
    scale = gamma * jax.lax.rsqrt(var + eps)
    return scale, beta - mean * scale


# ---------------------------------------------------------------------------
# Fused Bottle2neck kernel: one batch element per grid step.
#   conv1(1x1)+bn1+relu  ->  nums x (k=5 conv + bn + relu, hierarchical adds)
#   -> channel concat (+ pass-through last split)  ->  conv3(1x1)+bn3
#   -> + identity residual -> relu -> single lane-dense store.
# ---------------------------------------------------------------------------
def _bottle2neck_kernel(x_ref, w1_ref, s1_ref, b1_ref,
                        wmid_ref, smid_ref, bmid_ref,
                        w3_ref, s3_ref, b3_ref, o_ref, *,
                        nums, width, ksize, length):
    pad = (ksize - 1) // 2
    c4 = w1_ref.shape[1]

    x = x_ref[0]                                            # (L, Cin): conv1 input + residual

    # ---- conv1 (1x1) + folded bn1 + relu --------------------------------
    h = jnp.dot(x, w1_ref[...], preferred_element_type=jnp.float32)
    h = jnp.maximum(h * s1_ref[...] + b1_ref[...], 0.0)     # (L, C4)

    # zero halo rows (replaces the wrapper-side jnp.pad / extra HBM copy)
    zc4 = jnp.zeros((pad, c4), jnp.float32)
    hp = jnp.concatenate([zc4, h, zc4], axis=0)             # (L + 2*pad, C4)

    # ---- multi-scale branch ---------------------------------------------
    # Per split: the k=5 conv is a single (L, K*W) @ (K*W, W) matmul built
    # from the K shifted slices of the zero-padded split input.
    parts = []
    sp_pad = None
    zw = jnp.zeros((pad, width), jnp.float32)
    for i in range(nums):
        xi = hp[:, i * width:(i + 1) * width]                # (Lp, W), halo rows are zero
        inp = xi if i == 0 else sp_pad + xi                  # hierarchical add
        shifted = jnp.concatenate(
            [inp[k:k + length, :] for k in range(ksize)], axis=-1)    # (L, K*W)
        acc = jnp.dot(shifted, wmid_ref[i], preferred_element_type=jnp.float32)
        y = jnp.maximum(acc * smid_ref[i] + bmid_ref[i], 0.0)         # bn_i + relu
        parts.append(y)
        if i + 1 < nums:
            sp_pad = jnp.concatenate([zw, y, zw], axis=0)    # re-embed with zero halo
    if nums * width < c4:                                    # 'normal': last split pass-through
        parts.append(h[:, nums * width:])
    mid = jnp.concatenate(parts, axis=-1)                    # (L, C4)

    # ---- conv3 (1x1) + folded bn3 + identity residual + relu -------------
    out = jnp.dot(mid, w3_ref[...], preferred_element_type=jnp.float32)
    out = jnp.maximum(out * s3_ref[...] + b3_ref[...] + x, 0.0)
    o_ref[0] = out                                           # single 128-lane-dense store


def bottle2neck_forward(params, x, *, ksize=5):
    n, cin, length = x.shape
    c4 = params["w1"].shape[1]
    cout = params["w3"].shape[1]
    nums, ks, width, _ = params["wmid"].shape
    assert ks == ksize
    assert cin == cout, "identity residual requires inplanes == planes*expansion"

    xn = jnp.transpose(x, (0, 2, 1))                          # NCL -> NLC (channels on lanes)
    # (nums, K, W_in, W_out) -> (nums, K*W_in, W_out); row index = k*W + c,
    # matching the column layout of the shifted-concat LHS built in-kernel.
    wmid_flat = params["wmid"].reshape(nums, ksize * width, width)

    kern = functools.partial(_bottle2neck_kernel, nums=nums, width=width,
                             ksize=ksize, length=length)
    out = pl.pallas_call(
        kern,
        out_shape=jax.ShapeDtypeStruct((n, length, cout), jnp.float32),
        grid=(n,),
        in_specs=[
            pl.BlockSpec((1, length, cin), lambda b: (b, 0, 0)),
            pl.BlockSpec((cin, c4), lambda b: (0, 0)),
            pl.BlockSpec((1, c4), lambda b: (0, 0)),
            pl.BlockSpec((1, c4), lambda b: (0, 0)),
            pl.BlockSpec((nums, ksize * width, width), lambda b: (0, 0, 0)),
            pl.BlockSpec((nums, 1, width), lambda b: (0, 0, 0)),
            pl.BlockSpec((nums, 1, width), lambda b: (0, 0, 0)),
            pl.BlockSpec((c4, cout), lambda b: (0, 0)),
            pl.BlockSpec((1, cout), lambda b: (0, 0)),
            pl.BlockSpec((1, cout), lambda b: (0, 0)),
        ],
        out_specs=pl.BlockSpec((1, length, cout), lambda b: (b, 0, 0)),
        compiler_params=pltpu.CompilerParams(dimension_semantics=("parallel",)),
    )(xn,
      params["w1"], params["s1"].reshape(1, c4), params["b1"].reshape(1, c4),
      wmid_flat, params["smid"], params["bmid"],
      params["w3"], params["s3"].reshape(1, cout), params["b3"].reshape(1, cout))
    return jnp.transpose(out, (0, 2, 1))                      # back to NCL


# ---------------------------------------------------------------------------
# Pure-JAX reference (same math, XLA-executed) for a correctness check.
# ---------------------------------------------------------------------------
def reference_forward(params, x, *, width, scale, ksize=5):
    hi = jax.lax.Precision.HIGHEST
    n, cin, length = x.shape
    pad = (ksize - 1) // 2
    nums = 1 if scale == 1 else scale - 1
    xn = jnp.transpose(x, (0, 2, 1))
    h = jnp.maximum(jnp.einsum("nlc,cd->nld", xn, params["w1"], precision=hi)
                    * params["s1"] + params["b1"], 0.0)
    hp = jnp.pad(h, ((0, 0), (pad, pad), (0, 0)))
    parts = []
    sp_pad = None
    for i in range(nums):
        xi = hp[:, :, i * width:(i + 1) * width]
        inp = xi if i == 0 else sp_pad + xi
        acc = jnp.zeros((n, length, width), jnp.float32)
        for k in range(ksize):
            acc = acc + jnp.einsum("nlc,cd->nld", inp[:, k:k + length, :],
                                   params["wmid"][i, k], precision=hi)
        y = jnp.maximum(acc * params["smid"][i] + params["bmid"][i], 0.0)
        parts.append(y)
        sp_pad = jnp.pad(y, ((0, 0), (pad, pad), (0, 0)))
    if scale != 1:
        parts.append(h[:, :, nums * width:])
    mid = jnp.concatenate(parts, axis=-1)
    out = (jnp.einsum("nlc,cd->nld", mid, params["w3"], precision=hi)
           * params["s3"] + params["b3"] + xn)
    out = jnp.maximum(out, 0.0)
    return jnp.transpose(out, (0, 2, 1))


# ---------------------------------------------------------------------------
# Deterministic parameter construction (folded inference-mode BatchNorm)
# ---------------------------------------------------------------------------
def make_params(key, inplanes, planes, *, base_width=64, scale=4, expansion=4, ksize=5):
    width = int(math.floor(planes * (base_width / 64.0)))
    c4 = width * scale
    cout = planes * expansion
    nums = 1 if scale == 1 else scale - 1
    ks = jax.random.split(key, 6)

    def bn_affine(k, c):
        kg, kb, km, kv = jax.random.split(k, 4)
        gamma = 1.0 + 0.1 * jax.random.normal(kg, (c,), jnp.float32)
        beta = 0.1 * jax.random.normal(kb, (c,), jnp.float32)
        mean = 0.1 * jax.random.normal(km, (c,), jnp.float32)
        var = jax.random.uniform(kv, (c,), jnp.float32, 0.5, 1.5)
        return _fold_bn(gamma, beta, mean, var)

    p = {}
    w1 = 0.1 * jax.random.normal(ks[0], (c4, inplanes), jnp.float32)  # torch (out,in,1)
    p["w1"] = w1.T                                                    # (in, out)
    p["s1"], p["b1"] = bn_affine(ks[1], c4)

    wm = 0.1 * jax.random.normal(ks[2], (nums, width, width, ksize), jnp.float32)
    p["wmid"] = jnp.transpose(wm, (0, 3, 2, 1))                       # (nums, K, in, out)
    smid, bmid = [], []
    for bk in jax.random.split(ks[3], nums):
        s_i, b_i = bn_affine(bk, width)
        smid.append(s_i[None, :]); bmid.append(b_i[None, :])
    p["smid"] = jnp.stack(smid)                                       # (nums, 1, width)
    p["bmid"] = jnp.stack(bmid)

    w3 = 0.1 * jax.random.normal(ks[4], (cout, c4), jnp.float32)      # torch (out,in,1)
    p["w3"] = w3.T
    p["s3"], p["b3"] = bn_affine(ks[5], cout)
    return p, width


if __name__ == "__main__":
    key = jax.random.PRNGKey(0)
    kx, kp = jax.random.split(key)

    # Small, lane-friendly Bottle2neck config: planes=32, baseWidth=64, scale=4
    #   -> width=32, width*scale=128, out channels = planes*expansion = 128.
    # stride=1, stype='normal', downsample=None  => inplanes must equal 128.
    N, L = 2, 16
    planes, base_width, scale_, expansion = 32, 64, 4, 4
    inplanes = planes * expansion

    params, width = make_params(kp, inplanes, planes,
                                base_width=base_width, scale=scale_,
                                expansion=expansion)
    x = jax.random.normal(kx, (N, inplanes, L), jnp.float32)

    fwd = jax.jit(functools.partial(bottle2neck_forward, params))
    out = fwd(x)
    jax.block_until_ready(out)
    assert out.shape == (N, inplanes, L)

    ref = reference_forward(params, x, width=width, scale=scale_)
    err = float(jnp.max(jnp.abs(out - ref)))
    assert err < 5e-2, f"mismatch vs reference: max abs err = {err}"

    print("KERNEL_OK")
</pallas_src>

<mosaic_0001>
module attributes {stable_mosaic.version = 11 : i64} {
  func.func @_bottle2neck_kernel(%arg0: i32, %arg1: memref<1x16x128xf32, #tpu.memory_space<vmem>>, %arg2: memref<128x128xf32, #tpu.memory_space<vmem>>, %arg3: memref<1x128xf32, #tpu.memory_space<vmem>>, %arg4: memref<1x128xf32, #tpu.memory_space<vmem>>, %arg5: memref<3x160x32xf32, #tpu.memory_space<vmem>>, %arg6: memref<3x1x32xf32, #tpu.memory_space<vmem>>, %arg7: memref<3x1x32xf32, #tpu.memory_space<vmem>>, %arg8: memref<128x128xf32, #tpu.memory_space<vmem>>, %arg9: memref<1x128xf32, #tpu.memory_space<vmem>>, %arg10: memref<1x128xf32, #tpu.memory_space<vmem>>, %arg11: memref<1x16x128xf32, #tpu.memory_space<vmem>>) attributes {dimension_semantics = [#tpu.dimension_semantics<parallel>], iteration_bounds = array<i64: 2>, scalar_prefetch = 0 : i64, scratch_operands = 0 : i64, tpu.core_type = #tpu.core_type<tc>, window_params = [{transform_indices = @transform_0, window_bounds = array<i64: 1, 16, 128>}, {pipeline_mode = #tpu.pipeline_mode<synchronous>, transform_indices = @transform_1, window_bounds = array<i64: 128, 128>}, {pipeline_mode = #tpu.pipeline_mode<synchronous>, transform_indices = @transform_2, window_bounds = array<i64: 1, 128>}, {pipeline_mode = #tpu.pipeline_mode<synchronous>, transform_indices = @transform_3, window_bounds = array<i64: 1, 128>}, {pipeline_mode = #tpu.pipeline_mode<synchronous>, transform_indices = @transform_4, window_bounds = array<i64: 3, 160, 32>}, {pipeline_mode = #tpu.pipeline_mode<synchronous>, transform_indices = @transform_5, window_bounds = array<i64: 3, 1, 32>}, {pipeline_mode = #tpu.pipeline_mode<synchronous>, transform_indices = @transform_6, window_bounds = array<i64: 3, 1, 32>}, {pipeline_mode = #tpu.pipeline_mode<synchronous>, transform_indices = @transform_7, window_bounds = array<i64: 128, 128>}, {pipeline_mode = #tpu.pipeline_mode<synchronous>, transform_indices = @transform_8, window_bounds = array<i64: 1, 128>}, {pipeline_mode = #tpu.pipeline_mode<synchronous>, transform_indices = @transform_9, window_bounds = array<i64: 1, 128>}, {transform_indices = @transform_10, window_bounds = array<i64: 1, 16, 128>}]} {
    %c0 = arith.constant 0 : index
    %c0_0 = arith.constant 0 : index
    %c0_1 = arith.constant 0 : index
    %0 = vector.load %arg1[%c0, %c0_0, %c0_1] : memref<1x16x128xf32, #tpu.memory_space<vmem>>, vector<1x16x128xf32>
    %1 = vector.shape_cast %0 : vector<1x16x128xf32> to vector<16x128xf32>
    %c0_2 = arith.constant 0 : index
    %c0_3 = arith.constant 0 : index
    %2 = vector.load %arg2[%c0_2, %c0_3] : memref<128x128xf32, #tpu.memory_space<vmem>>, vector<128x128xf32>
    %cst = arith.constant dense<0.000000e+00> : vector<16x128xf32>
    %3 = tpu.matmul %1, %2, %cst {dimension_numbers = #tpu.dot_dimension_numbers<[1], [0], [0], [1], [0, 0, 1, 1], [], []>} : vector<16x128xf32>, vector<128x128xf32>, vector<16x128xf32> -> vector<16x128xf32>
    %c0_4 = arith.constant 0 : index
    %c0_5 = arith.constant 0 : index
    %4 = vector.load %arg3[%c0_4, %c0_5] : memref<1x128xf32, #tpu.memory_space<vmem>>, vector<1x128xf32>
    %5 = vector.broadcast %4 : vector<1x128xf32> to vector<16x128xf32>
    %6 = arith.mulf %3, %5 : vector<16x128xf32>
    %c0_6 = arith.constant 0 : index
    %c0_7 = arith.constant 0 : index
    %7 = vector.load %arg4[%c0_6, %c0_7] : memref<1x128xf32, #tpu.memory_space<vmem>>, vector<1x128xf32>
    %8 = vector.broadcast %7 : vector<1x128xf32> to vector<16x128xf32>
    %9 = arith.addf %6, %8 : vector<16x128xf32>
    %cst_8 = arith.constant 0.000000e+00 : f32
    %10 = vector.broadcast %cst_8 : f32 to vector<16x128xf32>
    %11 = arith.maximumf %9, %10 : vector<16x128xf32>
    %cst_9 = arith.constant 0.000000e+00 : f32
    %12 = vector.broadcast %cst_9 : f32 to vector<2x128xf32>
    %13 = tpu.concatenate %12, %11, %12 in 0 : vector<2x128xf32>, vector<16x128xf32>, vector<2x128xf32> -> vector<20x128xf32>
    %cst_10 = arith.constant 0.000000e+00 : f32
    %14 = vector.broadcast %cst_10 : f32 to vector<2x32xf32>
    %15 = vector.extract_strided_slice %13 {offsets = [0, 0], sizes = [20, 32], strides = [1, 1]} : vector<20x128xf32> to vector<20x32xf32>
    %16 = vector.extract_strided_slice %15 {offsets = [0, 0], sizes = [16, 32], strides = [1, 1]} : vector<20x32xf32> to vector<16x32xf32>
    %17 = vector.extract_strided_slice %15 {offsets = [1, 0], sizes = [16, 32], strides = [1, 1]} : vector<20x32xf32> to vector<16x32xf32>
    %18 = vector.extract_strided_slice %15 {offsets = [2, 0], sizes = [16, 32], strides = [1, 1]} : vector<20x32xf32> to vector<16x32xf32>
    %19 = vector.extract_strided_slice %15 {offsets = [3, 0], sizes = [16, 32], strides = [1, 1]} : vector<20x32xf32> to vector<16x32xf32>
    %20 = vector.extract_strided_slice %15 {offsets = [4, 0], sizes = [16, 32], strides = [1, 1]} : vector<20x32xf32> to vector<16x32xf32>
    %21 = tpu.concatenate %16, %17, %18, %19, %20 in 1 : vector<16x32xf32>, vector<16x32xf32>, vector<16x32xf32>, vector<16x32xf32>, vector<16x32xf32> -> vector<16x160xf32>
    %c0_11 = arith.constant 0 : index
    %c0_12 = arith.constant 0 : index
    %c0_13 = arith.constant 0 : index
    %22 = vector.load %arg5[%c0_11, %c0_12, %c0_13] : memref<3x160x32xf32, #tpu.memory_space<vmem>>, vector<1x160x32xf32>
    %23 = vector.shape_cast %22 : vector<1x160x32xf32> to vector<160x32xf32>
    %cst_14 = arith.constant dense<0.000000e+00> : vector<16x32xf32>
    %24 = tpu.matmul %21, %23, %cst_14 {dimension_numbers = #tpu.dot_dimension_numbers<[1], [0], [0], [1], [0, 0, 1, 1], [], []>} : vector<16x160xf32>, vector<160x32xf32>, vector<16x32xf32> -> vector<16x32xf32>
    %c0_15 = arith.constant 0 : index
    %c0_16 = arith.constant 0 : index
    %c0_17 = arith.constant 0 : index
    %25 = vector.load %arg6[%c0_15, %c0_16, %c0_17] : memref<3x1x32xf32, #tpu.memory_space<vmem>>, vector<1x1x32xf32>
    %26 = vector.shape_cast %25 : vector<1x1x32xf32> to vector<1x32xf32>
    %27 = vector.broadcast %26 : vector<1x32xf32> to vector<16x32xf32>
    %28 = arith.mulf %24, %27 : vector<16x32xf32>
    %c0_18 = arith.constant 0 : index
    %c0_19 = arith.constant 0 : index
    %c0_20 = arith.constant 0 : index
    %29 = vector.load %arg7[%c0_18, %c0_19, %c0_20] : memref<3x1x32xf32, #tpu.memory_space<vmem>>, vector<1x1x32xf32>
    %30 = vector.shape_cast %29 : vector<1x1x32xf32> to vector<1x32xf32>
    %31 = vector.broadcast %30 : vector<1x32xf32> to vector<16x32xf32>
    %32 = arith.addf %28, %31 : vector<16x32xf32>
    %cst_21 = arith.constant 0.000000e+00 : f32
    %33 = vector.broadcast %cst_21 : f32 to vector<16x32xf32>
    %34 = arith.maximumf %32, %33 : vector<16x32xf32>
    %35 = tpu.concatenate %14, %34, %14 in 0 : vector<2x32xf32>, vector<16x32xf32>, vector<2x32xf32> -> vector<20x32xf32>
    %36 = vector.extract_strided_slice %13 {offsets = [0, 32], sizes = [20, 32], strides = [1, 1]} : vector<20x128xf32> to vector<20x32xf32>
    %37 = arith.addf %35, %36 : vector<20x32xf32>
    %38 = vector.extract_strided_slice %37 {offsets = [0, 0], sizes = [16, 32], strides = [1, 1]} : vector<20x32xf32> to vector<16x32xf32>
    %39 = vector.extract_strided_slice %37 {offsets = [1, 0], sizes = [16, 32], strides = [1, 1]} : vector<20x32xf32> to vector<16x32xf32>
    %40 = vector.extract_strided_slice %37 {offsets = [2, 0], sizes = [16, 32], strides = [1, 1]} : vector<20x32xf32> to vector<16x32xf32>
    %41 = vector.extract_strided_slice %37 {offsets = [3, 0], sizes = [16, 32], strides = [1, 1]} : vector<20x32xf32> to vector<16x32xf32>
    %42 = vector.extract_strided_slice %37 {offsets = [4, 0], sizes = [16, 32], strides = [1, 1]} : vector<20x32xf32> to vector<16x32xf32>
    %43 = tpu.concatenate %38, %39, %40, %41, %42 in 1 : vector<16x32xf32>, vector<16x32xf32>, vector<16x32xf32>, vector<16x32xf32>, vector<16x32xf32> -> vector<16x160xf32>
    %c1 = arith.constant 1 : index
    %c0_22 = arith.constant 0 : index
    %c0_23 = arith.constant 0 : index
    %44 = vector.load %arg5[%c1, %c0_22, %c0_23] : memref<3x160x32xf32, #tpu.memory_space<vmem>>, vector<1x160x32xf32>
    %45 = vector.shape_cast %44 : vector<1x160x32xf32> to vector<160x32xf32>
    %cst_24 = arith.constant dense<0.000000e+00> : vector<16x32xf32>
    %46 = tpu.matmul %43, %45, %cst_24 {dimension_numbers = #tpu.dot_dimension_numbers<[1], [0], [0], [1], [0, 0, 1, 1], [], []>} : vector<16x160xf32>, vector<160x32xf32>, vector<16x32xf32> -> vector<16x32xf32>
    %c1_25 = arith.constant 1 : index
    %c0_26 = arith.constant 0 : index
    %c0_27 = arith.constant 0 : index
    %47 = vector.load %arg6[%c1_25, %c0_26, %c0_27] : memref<3x1x32xf32, #tpu.memory_space<vmem>>, vector<1x1x32xf32>
    %48 = vector.shape_cast %47 : vector<1x1x32xf32> to vector<1x32xf32>
    %49 = vector.broadcast %48 : vector<1x32xf32> to vector<16x32xf32>
    %50 = arith.mulf %46, %49 : vector<16x32xf32>
    %c1_28 = arith.constant 1 : index
    %c0_29 = arith.constant 0 : index
    %c0_30 = arith.constant 0 : index
    %51 = vector.load %arg7[%c1_28, %c0_29, %c0_30] : memref<3x1x32xf32, #tpu.memory_space<vmem>>, vector<1x1x32xf32>
    %52 = vector.shape_cast %51 : vector<1x1x32xf32> to vector<1x32xf32>
    %53 = vector.broadcast %52 : vector<1x32xf32> to vector<16x32xf32>
    %54 = arith.addf %50, %53 : vector<16x32xf32>
    %cst_31 = arith.constant 0.000000e+00 : f32
    %55 = vector.broadcast %cst_31 : f32 to vector<16x32xf32>
    %56 = arith.maximumf %54, %55 : vector<16x32xf32>
    %57 = tpu.concatenate %14, %56, %14 in 0 : vector<2x32xf32>, vector<16x32xf32>, vector<2x32xf32> -> vector<20x32xf32>
    %58 = vector.extract_strided_slice %13 {offsets = [0, 64], sizes = [20, 32], strides = [1, 1]} : vector<20x128xf32> to vector<20x32xf32>
    %59 = arith.addf %57, %58 : vector<20x32xf32>
    %60 = vector.extract_strided_slice %59 {offsets = [0, 0], sizes = [16, 32], strides = [1, 1]} : vector<20x32xf32> to vector<16x32xf32>
    %61 = vector.extract_strided_slice %59 {offsets = [1, 0], sizes = [16, 32], strides = [1, 1]} : vector<20x32xf32> to vector<16x32xf32>
    %62 = vector.extract_strided_slice %59 {offsets = [2, 0], sizes = [16, 32], strides = [1, 1]} : vector<20x32xf32> to vector<16x32xf32>
    %63 = vector.extract_strided_slice %59 {offsets = [3, 0], sizes = [16, 32], strides = [1, 1]} : vector<20x32xf32> to vector<16x32xf32>
    %64 = vector.extract_strided_slice %59 {offsets = [4, 0], sizes = [16, 32], strides = [1, 1]} : vector<20x32xf32> to vector<16x32xf32>
    %65 = tpu.concatenate %60, %61, %62, %63, %64 in 1 : vector<16x32xf32>, vector<16x32xf32>, vector<16x32xf32>, vector<16x32xf32>, vector<16x32xf32> -> vector<16x160xf32>
    %c2 = arith.constant 2 : index
    %c0_32 = arith.constant 0 : index
    %c0_33 = arith.constant 0 : index
    %66 = vector.load %arg5[%c2, %c0_32, %c0_33] : memref<3x160x32xf32, #tpu.memory_space<vmem>>, vector<1x160x32xf32>
    %67 = vector.shape_cast %66 : vector<1x160x32xf32> to vector<160x32xf32>
    %cst_34 = arith.constant dense<0.000000e+00> : vector<16x32xf32>
    %68 = tpu.matmul %65, %67, %cst_34 {dimension_numbers = #tpu.dot_dimension_numbers<[1], [0], [0], [1], [0, 0, 1, 1], [], []>} : vector<16x160xf32>, vector<160x32xf32>, vector<16x32xf32> -> vector<16x32xf32>
    %c2_35 = arith.constant 2 : index
    %c0_36 = arith.constant 0 : index
    %c0_37 = arith.constant 0 : index
    %69 = vector.load %arg6[%c2_35, %c0_36, %c0_37] : memref<3x1x32xf32, #tpu.memory_space<vmem>>, vector<1x1x32xf32>
    %70 = vector.shape_cast %69 : vector<1x1x32xf32> to vector<1x32xf32>
    %71 = vector.broadcast %70 : vector<1x32xf32> to vector<16x32xf32>
    %72 = arith.mulf %68, %71 : vector<16x32xf32>
    %c2_38 = arith.constant 2 : index
    %c0_39 = arith.constant 0 : index
    %c0_40 = arith.constant 0 : index
    %73 = vector.load %arg7[%c2_38, %c0_39, %c0_40] : memref<3x1x32xf32, #tpu.memory_space<vmem>>, vector<1x1x32xf32>
    %74 = vector.shape_cast %73 : vector<1x1x32xf32> to vector<1x32xf32>
    %75 = vector.broadcast %74 : vector<1x32xf32> to vector<16x32xf32>
    %76 = arith.addf %72, %75 : vector<16x32xf32>
    %cst_41 = arith.constant 0.000000e+00 : f32
    %77 = vector.broadcast %cst_41 : f32 to vector<16x32xf32>
    %78 = arith.maximumf %76, %77 : vector<16x32xf32>
    %79 = vector.extract_strided_slice %11 {offsets = [0, 96], sizes = [16, 32], strides = [1, 1]} : vector<16x128xf32> to vector<16x32xf32>
    %80 = tpu.concatenate %34, %56, %78, %79 in 1 : vector<16x32xf32>, vector<16x32xf32>, vector<16x32xf32>, vector<16x32xf32> -> vector<16x128xf32>
    %c0_42 = arith.constant 0 : index
    %c0_43 = arith.constant 0 : index
    %81 = vector.load %arg8[%c0_42, %c0_43] : memref<128x128xf32, #tpu.memory_space<vmem>>, vector<128x128xf32>
    %cst_44 = arith.constant dense<0.000000e+00> : vector<16x128xf32>
    %82 = tpu.matmul %80, %81, %cst_44 {dimension_numbers = #tpu.dot_dimension_numbers<[1], [0], [0], [1], [0, 0, 1, 1], [], []>} : vector<16x128xf32>, vector<128x128xf32>, vector<16x128xf32> -> vector<16x128xf32>
    %c0_45 = arith.constant 0 : index
    %c0_46 = arith.constant 0 : index
    %83 = vector.load %arg9[%c0_45, %c0_46] : memref<1x128xf32, #tpu.memory_space<vmem>>, vector<1x128xf32>
    %84 = vector.broadcast %83 : vector<1x128xf32> to vector<16x128xf32>
    %85 = arith.mulf %82, %84 : vector<16x128xf32>
    %c0_47 = arith.constant 0 : index
    %c0_48 = arith.constant 0 : index
    %86 = vector.load %arg10[%c0_47, %c0_48] : memref<1x128xf32, #tpu.memory_space<vmem>>, vector<1x128xf32>
    %87 = vector.broadcast %86 : vector<1x128xf32> to vector<16x128xf32>
    %88 = arith.addf %85, %87 : vector<16x128xf32>
    %89 = arith.addf %88, %1 : vector<16x128xf32>
    %cst_49 = arith.constant 0.000000e+00 : f32
    %90 = vector.broadcast %cst_49 : f32 to vector<16x128xf32>
    %91 = arith.maximumf %89, %90 : vector<16x128xf32>
    %c0_50 = arith.constant 0 : index
    %c0_51 = arith.constant 0 : index
    %c0_52 = arith.constant 0 : index
    %92 = vector.load %arg11[%c0_50, %c0_51, %c0_52] : memref<1x16x128xf32, #tpu.memory_space<vmem>>, vector<1x16x128xf32>
    %93 = vector.shape_cast %92 : vector<1x16x128xf32> to vector<16x128xf32>
    %94 = vector.shape_cast %91 : vector<16x128xf32> to vector<1x16x128xf32>
    tpu.vector_store %arg11[%c0_50, %c0_51, %c0_52], %94 {strides = array<i32>} : memref<1x16x128xf32, #tpu.memory_space<vmem>>, vector<1x16x128xf32>,
    return
  }
  func.func @transform_0(%arg0: i32) -> (i32, i32, i32) {
    %c0_i32 = arith.constant 0 : i32
    %c0_i32_0 = arith.constant 0 : i32
    %c0_i32_1 = arith.constant 0 : i32
    return %arg0, %c0_i32, %c0_i32_0 : i32, i32, i32
  }
  func.func @transform_1(%arg0: i32) -> (i32, i32) {
    %c0_i32 = arith.constant 0 : i32
    %c0_i32_0 = arith.constant 0 : i32
    %c0_i32_1 = arith.constant 0 : i32
    return %c0_i32, %c0_i32_0 : i32, i32
  }
  func.func @transform_2(%arg0: i32) -> (i32, i32) {
    %c0_i32 = arith.constant 0 : i32
    %c0_i32_0 = arith.constant 0 : i32
    %c0_i32_1 = arith.constant 0 : i32
    return %c0_i32, %c0_i32_0 : i32, i32
  }
  func.func @transform_3(%arg0: i32) -> (i32, i32) {
    %c0_i32 = arith.constant 0 : i32
    %c0_i32_0 = arith.constant 0 : i32
    %c0_i32_1 = arith.constant 0 : i32
    return %c0_i32, %c0_i32_0 : i32, i32
  }
  func.func @transform_4(%arg0: i32) -> (i32, i32, i32) {
    %c0_i32 = arith.constant 0 : i32
    %c0_i32_0 = arith.constant 0 : i32
    %c0_i32_1 = arith.constant 0 : i32
    %c0_i32_2 = arith.constant 0 : i32
    return %c0_i32, %c0_i32_0, %c0_i32_1 : i32, i32, i32
  }
  func.func @transform_5(%arg0: i32) -> (i32, i32, i32) {
    %c0_i32 = arith.constant 0 : i32
    %c0_i32_0 = arith.constant 0 : i32
    %c0_i32_1 = arith.constant 0 : i32
    %c0_i32_2 = arith.constant 0 : i32
    return %c0_i32, %c0_i32_0, %c0_i32_1 : i32, i32, i32
  }
  func.func @transform_6(%arg0: i32) -> (i32, i32, i32) {
    %c0_i32 = arith.constant 0 : i32
    %c0_i32_0 = arith.constant 0 : i32
    %c0_i32_1 = arith.constant 0 : i32
    %c0_i32_2 = arith.constant 0 : i32
    return %c0_i32, %c0_i32_0, %c0_i32_1 : i32, i32, i32
  }
  func.func @transform_7(%arg0: i32) -> (i32, i32) {
    %c0_i32 = arith.constant 0 : i32
    %c0_i32_0 = arith.constant 0 : i32
    %c0_i32_1 = arith.constant 0 : i32
    return %c0_i32, %c0_i32_0 : i32, i32
  }
  func.func @transform_8(%arg0: i32) -> (i32, i32) {
    %c0_i32 = arith.constant 0 : i32
    %c0_i32_0 = arith.constant 0 : i32
    %c0_i32_1 = arith.constant 0 : i32
    return %c0_i32, %c0_i32_0 : i32, i32
  }
  func.func @transform_9(%arg0: i32) -> (i32, i32) {
    %c0_i32 = arith.constant 0 : i32
    %c0_i32_0 = arith.constant 0 : i32
    %c0_i32_1 = arith.constant 0 : i32
    return %c0_i32, %c0_i32_0 : i32, i32
  }
  func.func @transform_10(%arg0: i32) -> (i32, i32, i32) {
    %c0_i32 = arith.constant 0 : i32
    %c0_i32_0 = arith.constant 0 : i32
    %c0_i32_1 = arith.constant 0 : i32
    return %arg0, %c0_i32, %c0_i32_0 : i32, i32, i32
  }
}

</mosaic_0001>

<llo_original>
// kernel: bottle2neck_forward.1
$region0: #{bottle2neck_forward.1}
  #allocation0 [shape = 'u32[]', space=smem, size = 0x4, offset = 0x4, fixed_abs, tag = 'smem constant byte address 0x4 - core index']
  #allocation1 [shape = 'u32[144,128]{1,0:T(1,128)}', space=vmem, size = 0x12000, scoped, tag = 'internal scratch']
  %s0 = inlined_call_operand.hbm [shape: f32[2,16,128], index: 0, kind: input, shape index: {}]
  %s1 = inlined_call_operand.hbm [shape: f32[128,128], index: 1, kind: input, shape index: {}]
  %s2 = inlined_call_operand.vmem [shape: f32[1,128], index: 2, kind: input, shape index: {}]
  %s3 = inlined_call_operand.vmem [shape: f32[1,128], index: 3, kind: input, shape index: {}]
  %s4 = inlined_call_operand.hbm [shape: f32[3,160,32], index: 4, kind: input, shape index: {}]
  %s5 = inlined_call_operand.vmem [shape: f32[3,1,32], index: 5, kind: input, shape index: {}]
  %s6 = inlined_call_operand.vmem [shape: f32[3,1,32], index: 6, kind: input, shape index: {}]
  %s7 = inlined_call_operand.hbm [shape: f32[128,128], index: 7, kind: input, shape index: {}]
  %s8 = inlined_call_operand.vmem [shape: f32[1,128], index: 8, kind: input, shape index: {}]
  %s9 = inlined_call_operand.hbm [shape: f32[1,128], index: 9, kind: input, shape index: {}]
  %s10 = inlined_call_operand.hbm [shape: f32[2,16,128], index: 10, kind: output, shape index: {}]
  %s11 = sld [smem:[#allocation0]]
  $region93: #{bottle2neck_forward.1} parent=0
    _
  %s13 = ssub.s32 1, %s11
  %s14 = scalar_select 0, %s13, %s11
  $region1: #{bottle2neck_forward.1} parent=0
    #allocation2 [shape = 'u8[16384]{0}', space=vmem, size = 0x4000, scoped, tag = 'input window, operand 0']
    #allocation3 [shape = 's32[2]{0}', space=sflag, size = 0x8, scoped, tag = 'scoped memory for bottle2neck_forward.1']
    #allocation4 [shape = 's32[2]{0}', space=sflag, size = 0x8, scoped, tag = 'scoped memory for bottle2neck_forward.1']
    #allocation5 [shape = 'u8[65536]{0}', space=vmem, size = 0x10000, scoped, tag = 'input window, operand 1, single buffered']
    #allocation6 [shape = 's32[1]{0}', space=sflag, size = 0x4, scoped, tag = 'scoped memory for bottle2neck_forward.1']
    #allocation7 [shape = 'u8[245760]{0}', space=vmem, size = 0x3c000, scoped, tag = 'input window, operand 4, single buffered']
    #allocation8 [shape = 'u8[65536]{0}', space=vmem, size = 0x10000, scoped, tag = 'input window, operand 7, single buffered']
    #allocation9 [shape = 's32[1]{0}', space=sflag, size = 0x4, scoped, tag = 'scoped memory for bottle2neck_forward.1']
    #allocation10 [shape = 'u8[512]{0}', space=vmem, size = 0x400, scoped, tag = 'input window, operand 9, single buffered']
    #allocation11 [shape = 'u8[16384]{0}', space=vmem, size = 0x4000, scoped, tag = 'output window, operand 0']
    %15 = vsyncpa [#allocation3], 0
    %s16 = scalar_lea.sflag [#allocation3], 1
    %17 = vsyncpa %s16, 0
    %18 = vsyncpa [#allocation6], 0
    %19 = vsyncpa [#allocation9], 0
    %20 = vsyncpa [#allocation4], 0
    %s21 = scalar_lea.sflag [#allocation4], 1
    %22 = vsyncpa %s21, 0
    loop: start=0, step=1, limit=4
    $region2: #{bottle2neck_forward.1} parent=1 // loop_pre_header
      _
    $region3: #{bottle2neck_forward.1} parent=1 // loop_header
      %s24 = sphi 0, %s28
      %p25 = scmp.ge.s32.totalorder %s24, 4
      %s34 = sphi 0, %s36
      %s37 = sphi 0, %s34
      %s38 = sphi 0, %s37
      %s54 = sphi 0, %s38
      %s58 = sphi 0, %s58
      %s60 = sphi 0, %s58
      %s61 = sphi 0, %s60
      %s75 = sphi 0, %s61
      %s79 = sphi 0, %s79
      %s81 = sphi 0, %s79
      %s82 = sphi 0, %s81
      %s96 = sphi 0, %s82
      %s100 = sphi 0, %s100
      %s102 = sphi 0, %s100
      %s103 = sphi 0, %s102
      %s117 = sphi 0, %s103
      %s121 = sphi 0, %s121
      %s123 = sphi 0, %s121
      %s124 = sphi 0, %s123
      %s138 = sphi 0, %s124
      %s142 = sphi 0, %s142
      %s144 = sphi 0, %s142
      %s145 = sphi 0, %s144
      %s159 = sphi 0, %s145
      %s163 = sphi 0, %s163
      %s165 = sphi 0, %s163
      %s166 = sphi 0, %s165
      %s180 = sphi 0, %s166
      %s184 = sphi 0, %s184
      %s186 = sphi 0, %s184
      %s187 = sphi 0, %s186
      %s201 = sphi 0, %s187
      %s205 = sphi 0, %s205
      %s207 = sphi 0, %s205
      %s208 = sphi 0, %s207
      %s222 = sphi 0, %s208
      %s226 = sphi 0, %s226
      %s228 = sphi 0, %s226
      %s229 = sphi 0, %s228
      %s243 = sphi 0, %s229
      %s249 = sphi 0, %s251
      %s252 = sphi 0, %s249
      %s253 = sphi 0, %s252
      %s269 = sphi 0, %s253
    $region4: #{bottle2neck_forward.1} parent=1 // loop_header_branch
      %27 = sbr.rel (%p25) target = $region8
    $region5: #{bottle2neck_forward.1} parent=1 // loop_body
      %s29 = ssub.s32 %s24, 1
      %s30 = ssub.s32 %s24, 2
      %s31 = sadd.s32 %s24, 1
      %s32 = ssub.s32 %s24, %s31
      %p33 = scmp.eq.s32.totalorder %s32, 0
      %s35 = sadd.s32 %s34, 1
      %s36 = scalar_select %p33, %s34, %s35
      %p39 = pneg %p33
      %p40 = scmp.eq.s32.totalorder %s24, 1
      %p41 = por %p39, %p40
      %p42 = scmp.ne.s32.totalorder %s34, %s37
      %p43 = scmp.eq.s32.totalorder %s24, 0
      %p44 = por %p42, %p43
      %p45 = scmp.ne.s32.totalorder %s34, %s37
      %p46 = scmp.eq.s32.totalorder %s29, 1
      %p47 = por %p45, %p46
      %p48 = scmp.ne.s32.totalorder %s37, %s38
      %p49 = scmp.eq.s32.totalorder %s29, 0
      %p50 = por %p48, %p49
      %p51 = scmp.ne.s32.totalorder %s37, %s38
      %p52 = scmp.eq.s32.totalorder %s30, 1
      %p53 = por %p51, %p52
      %p55 = scmp.ne.s32.totalorder %s38, %s54
      %p56 = scmp.eq.s32.totalorder %s30, 0
      %p57 = por %p55, %p56
      %s59 = sadd.s32 %s58, 1
      %p62 = scmp.eq.s32.totalorder %s24, 1
      %p63 = scmp.ne.s32.totalorder %s58, %s60
      %p64 = scmp.eq.s32.totalorder %s24, 0
      %p65 = por %p63, %p64
      %p66 = scmp.ne.s32.totalorder %s58, %s60
      %p67 = scmp.eq.s32.totalorder %s29, 1
      %p68 = por %p66, %p67
      %p69 = scmp.ne.s32.totalorder %s60, %s61
      %p70 = scmp.eq.s32.totalorder %s29, 0
      %p71 = por %p69, %p70
      %p72 = scmp.ne.s32.totalorder %s60, %s61
      %p73 = scmp.eq.s32.totalorder %s30, 1
      %p74 = por %p72, %p73
      %p76 = scmp.ne.s32.totalorder %s61, %s75
      %p77 = scmp.eq.s32.totalorder %s30, 0
      %p78 = por %p76, %p77
      %s80 = sadd.s32 %s79, 1
      %p83 = scmp.eq.s32.totalorder %s24, 1
      %p84 = scmp.ne.s32.totalorder %s79, %s81
      %p85 = scmp.eq.s32.totalorder %s24, 0
      %p86 = por %p84, %p85
      %p87 = scmp.ne.s32.totalorder %s79, %s81
      %p88 = scmp.eq.s32.totalorder %s29, 1
      %p89 = por %p87, %p88
      %p90 = scmp.ne.s32.totalorder %s81, %s82
      %p91 = scmp.eq.s32.totalorder %s29, 0
      %p92 = por %p90, %p91
      %p93 = scmp.ne.s32.totalorder %s81, %s82
      %p94 = scmp.eq.s32.totalorder %s30, 1
      %p95 = por %p93, %p94
      %p97 = scmp.ne.s32.totalorder %s82, %s96
      %p98 = scmp.eq.s32.totalorder %s30, 0
      %p99 = por %p97, %p98
      %s101 = sadd.s32 %s100, 1
      %p104 = scmp.eq.s32.totalorder %s24, 1
      %p105 = scmp.ne.s32.totalorder %s100, %s102
      %p106 = scmp.eq.s32.totalorder %s24, 0
      %p107 = por %p105, %p106
      %p108 = scmp.ne.s32.totalorder %s100, %s102
      %p109 = scmp.eq.s32.totalorder %s29, 1
      %p110 = por %p108, %p109
      %p111 = scmp.ne.s32.totalorder %s102, %s103
      %p112 = scmp.eq.s32.totalorder %s29, 0
      %p113 = por %p111, %p112
      %p114 = scmp.ne.s32.totalorder %s102, %s103
      %p115 = scmp.eq.s32.totalorder %s30, 1
      %p116 = por %p114, %p115
      %p118 = scmp.ne.s32.totalorder %s103, %s117
      %p119 = scmp.eq.s32.totalorder %s30, 0
      %p120 = por %p118, %p119
      %s122 = sadd.s32 %s121, 1
      %p125 = scmp.eq.s32.totalorder %s24, 1
      %p126 = scmp.ne.s32.totalorder %s121, %s123
      %p127 = scmp.eq.s32.totalorder %s24, 0
      %p128 = por %p126, %p127
      %p129 = scmp.ne.s32.totalorder %s121, %s123
      %p130 = scmp.eq.s32.totalorder %s29, 1
      %p131 = por %p129, %p130
      %p132 = scmp.ne.s32.totalorder %s123, %s124
      %p133 = scmp.eq.s32.totalorder %s29, 0
      %p134 = por %p132, %p133
      %p135 = scmp.ne.s32.totalorder %s123, %s124
      %p136 = scmp.eq.s32.totalorder %s30, 1
      %p137 = por %p135, %p136
      %p139 = scmp.ne.s32.totalorder %s124, %s138
      %p140 = scmp.eq.s32.totalorder %s30, 0
      %p141 = por %p139, %p140
      %s143 = sadd.s32 %s142, 1
      %p146 = scmp.eq.s32.totalorder %s24, 1
      %p147 = scmp.ne.s32.totalorder %s142, %s144
      %p148 = scmp.eq.s32.totalorder %s24, 0
      %p149 = por %p147, %p148
      %p150 = scmp.ne.s32.totalorder %s142, %s144
      %p151 = scmp.eq.s32.totalorder %s29, 1
      %p152 = por %p150, %p151
      %p153 = scmp.ne.s32.totalorder %s144, %s145
      %p154 = scmp.eq.s32.totalorder %s29, 0
      %p155 = por %p153, %p154
      %p156 = scmp.ne.s32.totalorder %s144, %s145
      %p157 = scmp.eq.s32.totalorder %s30, 1
      %p158 = por %p156, %p157
      %p160 = scmp.ne.s32.totalorder %s145, %s159
      %p161 = scmp.eq.s32.totalorder %s30, 0
      %p162 = por %p160, %p161
      %s164 = sadd.s32 %s163, 1
      %p167 = scmp.eq.s32.totalorder %s24, 1
      %p168 = scmp.ne.s32.totalorder %s163, %s165
      %p169 = scmp.eq.s32.totalorder %s24, 0
      %p170 = por %p168, %p169
      %p171 = scmp.ne.s32.totalorder %s163, %s165
      %p172 = scmp.eq.s32.totalorder %s29, 1
      %p173 = por %p171, %p172
      %p174 = scmp.ne.s32.totalorder %s165, %s166
      %p175 = scmp.eq.s32.totalorder %s29, 0
      %p176 = por %p174, %p175
      %p177 = scmp.ne.s32.totalorder %s165, %s166
      %p178 = scmp.eq.s32.totalorder %s30, 1
      %p179 = por %p177, %p178
      %p181 = scmp.ne.s32.totalorder %s166, %s180
      %p182 = scmp.eq.s32.totalorder %s30, 0
      %p183 = por %p181, %p182
      %s185 = sadd.s32 %s184, 1
      %p188 = scmp.eq.s32.totalorder %s24, 1
      %p189 = scmp.ne.s32.totalorder %s184, %s186
      %p190 = scmp.eq.s32.totalorder %s24, 0
      %p191 = por %p189, %p190
      %p192 = scmp.ne.s32.totalorder %s184, %s186
      %p193 = scmp.eq.s32.totalorder %s29, 1
      %p194 = por %p192, %p193
      %p195 = scmp.ne.s32.totalorder %s186, %s187
      %p196 = scmp.eq.s32.totalorder %s29, 0
      %p197 = por %p195, %p196
      %p198 = scmp.ne.s32.totalorder %s186, %s187
      %p199 = scmp.eq.s32.totalorder %s30, 1
      %p200 = por %p198, %p199
      %p202 = scmp.ne.s32.totalorder %s187, %s201
      %p203 = scmp.eq.s32.totalorder %s30, 0
      %p204 = por %p202, %p203
      %s206 = sadd.s32 %s205, 1
      %p209 = scmp.eq.s32.totalorder %s24, 1
      %p210 = scmp.ne.s32.totalorder %s205, %s207
      %p211 = scmp.eq.s32.totalorder %s24, 0
      %p212 = por %p210, %p211
      %p213 = scmp.ne.s32.totalorder %s205, %s207
      %p214 = scmp.eq.s32.totalorder %s29, 1
      %p215 = por %p213, %p214
      %p216 = scmp.ne.s32.totalorder %s207, %s208
      %p217 = scmp.eq.s32.totalorder %s29, 0
      %p218 = por %p216, %p217
      %p219 = scmp.ne.s32.totalorder %s207, %s208
      %p220 = scmp.eq.s32.totalorder %s30, 1
      %p221 = por %p219, %p220
      %p223 = scmp.ne.s32.totalorder %s208, %s222
      %p224 = scmp.eq.s32.totalorder %s30, 0
      %p225 = por %p223, %p224
      %s227 = sadd.s32 %s226, 1
      %p230 = scmp.eq.s32.totalorder %s24, 1
      %p231 = scmp.ne.s32.totalorder %s226, %s228
      %p232 = scmp.eq.s32.totalorder %s24, 0
      %p233 = por %p231, %p232
      %p234 = scmp.ne.s32.totalorder %s226, %s228
      %p235 = scmp.eq.s32.totalorder %s29, 1
      %p236 = por %p234, %p235
      %p237 = scmp.ne.s32.totalorder %s228, %s229
      %p238 = scmp.eq.s32.totalorder %s29, 0
      %p239 = por %p237, %p238
      %p240 = scmp.ne.s32.totalorder %s228, %s229
      %p241 = scmp.eq.s32.totalorder %s30, 1
      %p242 = por %p240, %p241
      %p244 = scmp.ne.s32.totalorder %s229, %s243
      %p245 = scmp.eq.s32.totalorder %s30, 0
      %p246 = por %p244, %p245
      %s247 = ssub.s32 %s24, %s31
      %p248 = scmp.eq.s32.totalorder %s247, 0
      %s250 = sadd.s32 %s249, 1
      %s251 = scalar_select %p248, %s249, %s250
      %p254 = pneg %p248
      %p255 = scmp.eq.s32.totalorder %s24, 1
      %p256 = por %p254, %p255
      %p257 = scmp.ne.s32.totalorder %s249, %s252
      %p258 = scmp.eq.s32.totalorder %s24, 0
      %p259 = por %p257, %p258
      %p260 = scmp.ne.s32.totalorder %s249, %s252
      %p261 = scmp.eq.s32.totalorder %s29, 1
      %p262 = por %p260, %p261
      %p263 = scmp.ne.s32.totalorder %s252, %s253
      %p264 = scmp.eq.s32.totalorder %s29, 0
      %p265 = por %p263, %p264
      %p266 = scmp.ne.s32.totalorder %s252, %s253
      %p267 = scmp.eq.s32.totalorder %s30, 1
      %p268 = por %p266, %p267
      %p270 = scmp.ne.s32.totalorder %s253, %s269
      %p271 = scmp.eq.s32.totalorder %s30, 0
      %p272 = por %p270, %p271
      %p273 = scmp.le.s32.totalorder 1, %s24
      %p274 = scmp.lt.s32.totalorder %s24, 3
      %p275 = pnand %p273, %p274
      %p276 = pneg %p275
      // Predicated region
      $region9: #{bottle2neck_forward.1} parent=5 // pred_check
        _
      $region10: #{bottle2neck_forward.1} parent=5 // pred_check_branch
        %278 = sbr.rel (%p275) target = $region12
      $region11: #{bottle2neck_forward.1} parent=5 // pred_region
        %s279 = ssub.s32 %s24, 1
        // Predicated region
        $region13: #{bottle2neck_forward.1} parent=11 // pred_check
          %p280 = pneg %p71
        $region14: #{bottle2neck_forward.1} parent=11 // pred_check_branch
          %282 = sbr.rel (%p280) target = $region16
        $region15: #{bottle2neck_forward.1} parent=11 // pred_region
          %s284 = ssub.s32 2048, 2048
          %285 = vsyncadd [#allocation6], %s284
          %s286 = sshll.u32 [#allocation5], 4
          %s287 = int_to_ptr.vmem [resolvable:$true] %s286
          %292 = dma.hbm_to_vmem [thread:$0]  %s1, 2048, %s287, [#allocation6], 128, 128, 8
        $region16: #{bottle2neck_forward.1} parent=11 // pred_fallthru
          _
        // Predicated region
        $region17: #{bottle2neck_forward.1} parent=11 // pred_check
          %p293 = pneg %p92
        $region18: #{bottle2neck_forward.1} parent=11 // pred_check_branch
          %295 = sbr.rel (%p293) target = $region20
        $region19: #{bottle2neck_forward.1} parent=11 // pred_region
          _
        $region20: #{bottle2neck_forward.1} parent=11 // pred_fallthru
          _
        // Predicated region
        $region21: #{bottle2neck_forward.1} parent=11 // pred_check
          %p296 = pneg %p113
        $region22: #{bottle2neck_forward.1} parent=11 // pred_check_branch
          %298 = sbr.rel (%p296) target = $region24
        $region23: #{bottle2neck_forward.1} parent=11 // pred_region
          _
        $region24: #{bottle2neck_forward.1} parent=11 // pred_fallthru
          _
        // Predicated region
        $region25: #{bottle2neck_forward.1} parent=11 // pred_check
          %p299 = pneg %p134
        $region26: #{bottle2neck_forward.1} parent=11 // pred_check_branch
          %301 = sbr.rel (%p299) target = $region28
        $region27: #{bottle2neck_forward.1} parent=11 // pred_region
          %s303 = ssub.s32 7680, 7680
          %304 = vsyncadd [#allocation6], %s303
          %s305 = sshll.u32 [#allocation7], 4
          %s306 = int_to_ptr.vmem [resolvable:$true] %s305
          %311 = dma.hbm_to_vmem [thread:$0]  %s4, 7680, %s306, [#allocation6], 128, 128, 8
        $region28: #{bottle2neck_forward.1} parent=11 // pred_fallthru
          _
        // Predicated region
        $region29: #{bottle2neck_forward.1} parent=11 // pred_check
          %p312 = pneg %p155
        $region30: #{bottle2neck_forward.1} parent=11 // pred_check_branch
          %314 = sbr.rel (%p312) target = $region32
        $region31: #{bottle2neck_forward.1} parent=11 // pred_region
          _
        $region32: #{bottle2neck_forward.1} parent=11 // pred_fallthru
          _
        // Predicated region
        $region33: #{bottle2neck_forward.1} parent=11 // pred_check
          %p315 = pneg %p176
        $region34: #{bottle2neck_forward.1} parent=11 // pred_check_branch
          %317 = sbr.rel (%p315) target = $region36
        $region35: #{bottle2neck_forward.1} parent=11 // pred_region
          _
        $region36: #{bottle2neck_forward.1} parent=11 // pred_fallthru
          _
        // Predicated region
        $region37: #{bottle2neck_forward.1} parent=11 // pred_check
          %p318 = pneg %p197
        $region38: #{bottle2neck_forward.1} parent=11 // pred_check_branch
          %320 = sbr.rel (%p318) target = $region40
        $region39: #{bottle2neck_forward.1} parent=11 // pred_region
          %s322 = ssub.s32 2048, 2048
          %323 = vsyncadd [#allocation9], %s322
          %s324 = sshll.u32 [#allocation8], 4
          %s325 = int_to_ptr.vmem [resolvable:$true] %s324
          %330 = dma.hbm_to_vmem [thread:$0]  %s7, 2048, %s325, [#allocation9], 128, 128, 8
        $region40: #{bottle2neck_forward.1} parent=11 // pred_fallthru
          _
        // Predicated region
        $region41: #{bottle2neck_forward.1} parent=11 // pred_check
          %p331 = pneg %p218
        $region42: #{bottle2neck_forward.1} parent=11 // pred_check_branch
          %333 = sbr.rel (%p331) target = $region44
        $region43: #{bottle2neck_forward.1} parent=11 // pred_region
          _
        $region44: #{bottle2neck_forward.1} parent=11 // pred_fallthru
          _
        // Predicated region
        $region45: #{bottle2neck_forward.1} parent=11 // pred_check
          %p334 = pneg %p239
        $region46: #{bottle2neck_forward.1} parent=11 // pred_check_branch
          %336 = sbr.rel (%p334) target = $region48
        $region47: #{bottle2neck_forward.1} parent=11 // pred_region
          %s338 = ssub.s32 16, 16
          %339 = vsyncadd [#allocation9], %s338
          %s341 = sshll.u32 [#allocation10], 4
          %s342 = int_to_ptr.vmem [resolvable:$true] %s341
          %344 = dma.hbm_to_vmem [thread:$0]  %s9, 16, %s342, [#allocation9]
        $region48: #{bottle2neck_forward.1} parent=11 // pred_fallthru
          _
      $region12: #{bottle2neck_forward.1} parent=5 // pred_fallthru
        _
      %p345 = scmp.lt.s32.totalorder %s24, 2
      // Predicated region
      $region49: #{bottle2neck_forward.1} parent=5 // pred_check
        %p346 = pneg %p345
      $region50: #{bottle2neck_forward.1} parent=5 // pred_check_branch
        %348 = sbr.rel (%p346) target = $region52
      $region51: #{bottle2neck_forward.1} parent=5 // pred_region
        // Predicated region
        $region53: #{bottle2neck_forward.1} parent=51 // pred_check
          %p349 = pneg %p44
        $region54: #{bottle2neck_forward.1} parent=51 // pred_check_branch
          %351 = sbr.rel (%p349) target = $region56
        $region55: #{bottle2neck_forward.1} parent=51 // pred_region
          %s352 = sand.u32 %s34, 1
          %s353 = scalar_lea.sflag [#allocation3], %s352
          %s354 = sand.u32 %s34, 1
          %s355 = smul.addr %s354, 16
          %s356 = scalar_lea.vmem [#allocation2], %s355
          %s358 = ssub.s32 256, 256
          %359 = vsyncadd %s353, %s358
          %s360 = smul.addr %s24, 2
          %s361 = smul.addr %s360, 128
          %s362 = scalar_lea.hbm %s0, %s361
          %s363 = sshll.u32 %s356, 4
          %s364 = int_to_ptr.vmem [resolvable:$true] %s363
          %369 = dma.hbm_to_vmem [thread:$0]  %s362, 256, %s364, %s353, 128, 128, 8
        $region56: #{bottle2neck_forward.1} parent=51 // pred_fallthru
          _
      $region52: #{bottle2neck_forward.1} parent=5 // pred_fallthru
        _
      %p370 = scmp.le.s32.totalorder 1, %s24
      %p371 = scmp.lt.s32.totalorder %s24, 3
      %p372 = pnand %p370, %p371
      %p373 = pneg %p372
      // Predicated region
      $region57: #{bottle2neck_forward.1} parent=5 // pred_check
        _
      $region58: #{bottle2neck_forward.1} parent=5 // pred_check_branch
        %375 = sbr.rel (%p372) target = $region60
      $region59: #{bottle2neck_forward.1} parent=5 // pred_region
        %s376 = ssub.s32 %s24, 1
        %s377 = sand.u32 %s37, 1
        %s378 = scalar_lea.sflag [#allocation3], %s377
        %s379 = sand.u32 %s37, 1
        %s380 = smul.addr %s379, 16
        %s381 = scalar_lea.vmem [#allocation2], %s380
        // Predicated region
        $region61: #{bottle2neck_forward.1} parent=59 // pred_check
          %p382 = pneg %p50
        $region62: #{bottle2neck_forward.1} parent=59 // pred_check_branch
          %384 = sbr.rel (%p382) target = $region64
        $region63: #{bottle2neck_forward.1} parent=59 // pred_region
          %385 = dma.done %s378, 256
        $region64: #{bottle2neck_forward.1} parent=59 // pred_fallthru
          _
        // Predicated region
        $region65: #{bottle2neck_forward.1} parent=59 // pred_check
          %p386 = pneg %p71
        $region66: #{bottle2neck_forward.1} parent=59 // pred_check_branch
          %388 = sbr.rel (%p386) target = $region68
        $region67: #{bottle2neck_forward.1} parent=59 // pred_region
          %389 = dma.done [#allocation6], 2048
        $region68: #{bottle2neck_forward.1} parent=59 // pred_fallthru
          _
        // Predicated region
        $region69: #{bottle2neck_forward.1} parent=59 // pred_check
          %p390 = pneg %p134
        $region70: #{bottle2neck_forward.1} parent=59 // pred_check_branch
          %392 = sbr.rel (%p390) target = $region72
        $region71: #{bottle2neck_forward.1} parent=59 // pred_region
          %393 = dma.done [#allocation6], 7680
        $region72: #{bottle2neck_forward.1} parent=59 // pred_fallthru
          _
        // Predicated region
        $region73: #{bottle2neck_forward.1} parent=59 // pred_check
          %p394 = pneg %p197
        $region74: #{bottle2neck_forward.1} parent=59 // pred_check_branch
          %396 = sbr.rel (%p394) target = $region76
        $region75: #{bottle2neck_forward.1} parent=59 // pred_region
          %397 = dma.done [#allocation9], 2048
        $region76: #{bottle2neck_forward.1} parent=59 // pred_fallthru
          _
        // Predicated region
        $region77: #{bottle2neck_forward.1} parent=59 // pred_check
          %p398 = pneg %p239
        $region78: #{bottle2neck_forward.1} parent=59 // pred_check_branch
          %400 = sbr.rel (%p398) target = $region80
        $region79: #{bottle2neck_forward.1} parent=59 // pred_region
          %401 = dma.done [#allocation9], 16
        $region80: #{bottle2neck_forward.1} parent=59 // pred_fallthru
          _
        %s402 = sand.u32 %s37, 1
        %s403 = scalar_lea.sflag [#allocation3], %s402
        %s404 = sand.u32 %s37, 1
        %s405 = smul.addr %s404, 16
        %s406 = scalar_lea.vmem [#allocation2], %s405
        %p407 = pneg %p50
        %p408 = pneg %p47
        %p409 = pneg %p71
        %p410 = pneg %p68
        %p411 = pneg %p92
        %p412 = pneg %p89
        %p413 = pneg %p113
        %p414 = pneg %p110
        %p415 = pneg %p134
        %p416 = pneg %p131
        %p417 = pneg %p155
        %p418 = pneg %p152
        %p419 = pneg %p176
        %p420 = pneg %p173
        %p421 = pneg %p197
        %p422 = pneg %p194
        %p423 = pneg %p218
        %p424 = pneg %p215
        %p425 = pneg %p239
        %p426 = pneg %p236
        %p427 = pneg %p265
        %p428 = pneg %p262
        %s429 = sand.u32 %s252, 1
        %s430 = scalar_lea.sflag [#allocation4], %s429
        %s431 = sand.u32 %s252, 1
        %s432 = smul.addr %s431, 16
        %s433 = scalar_lea.vmem [#allocation11], %s432
        %v434 = vld [vmem:[%s381] sm:$0xff]
        %v435 = vld [vmem:[%s381 + $0x8] sm:$0xff]
        %v436 = vld [vmem:[#allocation5] sm:$0xff]
        %v437 = vld [vmem:[#allocation5 + $0x8] sm:$0xff]
        %v438 = vld [vmem:[#allocation5 + $0x10] sm:$0xff]
        %v439 = vld [vmem:[#allocation5 + $0x18] sm:$0xff]
        %v440 = vld [vmem:[#allocation5 + $0x20] sm:$0xff]
        %v441 = vld [vmem:[#allocation5 + $0x28] sm:$0xff]
        %v442 = vld [vmem:[#allocation5 + $0x30] sm:$0xff]
        %v443 = vld [vmem:[#allocation5 + $0x38] sm:$0xff]
        %v444 = vld [vmem:[#allocation5 + $0x40] sm:$0xff]
        %v445 = vld [vmem:[#allocation5 + $0x48] sm:$0xff]
        %v446 = vld [vmem:[#allocation5 + $0x50] sm:$0xff]
        %v447 = vld [vmem:[#allocation5 + $0x58] sm:$0xff]
        %v448 = vld [vmem:[#allocation5 + $0x60] sm:$0xff]
        %v449 = vld [vmem:[#allocation5 + $0x68] sm:$0xff]
        %v450 = vld [vmem:[#allocation5 + $0x70] sm:$0xff]
        %v451 = vld [vmem:[#allocation5 + $0x78] sm:$0xff]
        %452 = vmatprep.subr.mxu0 0.0
        %453 = vmatpush1.msra.mxu0 %v436
        %454 = vmatprep.subr.mxu0 0.0
        %455 = vmatpush1.msra.mxu0 %v437
        %456 = vmatprep.subr.mxu0 0.0
        %457 = vmatpush1.msra.mxu0 %v438
        %458 = vmatprep.subr.mxu0 0.0
        %459 = vmatpush1.msra.mxu0 %v439
        %460 = vmatprep.subr.mxu0 0.0
        %461 = vmatpush1.msra.mxu0 %v440
        %462 = vmatprep.subr.mxu0 0.0
        %463 = vmatpush1.msra.mxu0 %v441
        %464 = vmatprep.subr.mxu0 0.0
        %465 = vmatpush1.msra.mxu0 %v442
        %466 = vmatprep.subr.mxu0 0.0
        %467 = vmatpush1.msra.mxu0 %v443
        %468 = vmatprep.subr.mxu0 0.0
        %469 = vmatpush1.msra.mxu0 %v444
        %470 = vmatprep.subr.mxu0 0.0
        %471 = vmatpush1.msra.mxu0 %v445
        %472 = vmatprep.subr.mxu0 0.0
        %473 = vmatpush1.msra.mxu0 %v446
        %474 = vmatprep.subr.mxu0 0.0
        %475 = vmatpush1.msra.mxu0 %v447
        %476 = vmatprep.subr.mxu0 0.0
        %477 = vmatpush1.msra.mxu0 %v448
        %478 = vmatprep.subr.mxu0 0.0
        %479 = vmatpush1.msra.mxu0 %v449
        %480 = vmatprep.subr.mxu0 0.0
        %481 = vmatpush1.msra.mxu0 %v450
        %482 = vmatprep.subr.mxu0 0.0
        %483 = vmatpush1.msra.mxu0 %v451
        %484 = vmatprep.subr.mxu0 0.0
        %485 = vmatpush1.msra.mxu0 0.0
        %486 = vmatprep.subr.mxu0 0.0
        %487 = vmatpush1.msra.mxu0 0.0
        %488 = vmatprep.subr.mxu0 0.0
        %489 = vmatpush1.msra.mxu0 0.0
        %490 = vmatprep.subr.mxu0 0.0
        %491 = vmatpush1.msra.mxu0 0.0
        %492 = vmatprep.subr.mxu0 0.0
        %493 = vmatpush1.msra.mxu0 0.0
        %494 = vmatprep.subr.mxu0 0.0
        %495 = vmatpush1.msra.mxu0 0.0
        %496 = vmatprep.subr.mxu0 0.0
        %497 = vmatpush1.msra.mxu0 0.0
        %498 = vmatprep.subr.mxu0 0.0
        %499 = vmatpush1.msra.mxu0 0.0
        %500 = vmatprep.subr.mxu0 0.0
        %501 = vmatpush1.msra.mxu0 0.0
        %502 = vmatprep.subr.mxu0 0.0
        %503 = vmatpush1.msra.mxu0 0.0
        %504 = vmatprep.subr.mxu0 0.0
        %505 = vmatpush1.msra.mxu0 0.0
        %506 = vmatprep.subr.mxu0 0.0
        %507 = vmatpush1.msra.mxu0 0.0
        %508 = vmatprep.subr.mxu0 0.0
        %509 = vmatpush1.msra.mxu0 0.0
        %510 = vmatprep.subr.mxu0 0.0
        %511 = vmatpush1.msra.mxu0 0.0
        %512 = vmatprep.subr.mxu0 0.0
        %513 = vmatpush1.msra.mxu0 0.0
        %514 = vmatprep.subr.mxu0 0.0
        %515 = vmatpush1.msra.mxu0 0.0
        %516 = vmatprep.mubr.f32.mxu0 0.0
        %517 = vmatmul.mubr.f32.gmra.mrb[0].mxu0 %v434
        %v518 = vpop.f32.mrb[0].mxu0
        %v519 = vadd.f32 0.0, %v518
        %v520 = vpop.f32.mrb[0].mxu0
        %521 = vmatprep.mubr.f32.mxu0 0.0
        %522 = vmatmul.mubr.f32.gmra.mrb[0].mxu0 %v435
        %v523 = vpop.f32.mrb[0].mxu0
        %v524 = vadd.f32 0.0, %v523
        %v525 = vpop.f32.mrb[0].mxu0
        %526 = vdwg.mxu0
        %v527 = vld [vmem:[%s2] sm:$0x1]
        %v529 = vlaneseq
        %v530 = vshrl.u32 %v529, 7
        %v531 = vsub.s32 0, %v530
        %v532 = vrot.slane %v527, %v531
        %v534 = vmul.f32 %v519, %v532
        %v535 = vmul.f32 %v524, %v532
        %v536 = vld [vmem:[%s3] sm:$0x1]
        %v538 = vlaneseq
        %v539 = vshrl.u32 %v538, 7
        %v540 = vsub.s32 0, %v539
        %v541 = vrot.slane %v536, %v540
        %v543 = vadd.f32 %v534, %v541
        %v544 = vadd.f32 %v535, %v541
        %v545 = vmax.f32 %v543, 0.0
        %v546 = vmax.f32 %v544, 0.0
        %vm549 = vcmask 1041408
        %v550 = vrot.slane %v545, 6
        %v551 = vrot.slane %v546, 6
        %v552 = vsel %vm549, %v550, %v551
        %v556 = vsel %vm549, 0.0, %v550
        %v557 = vsel %vm549, %v551, 0.0
        %vm560 = vcmask 1046528
        %v561 = vrot.slane %v556, 1
        %v562 = vrot.slane %v552, 1
        %v563 = vsel %vm560, %v561, %v562
        %v564 = vrot.slane %v557, 1
        %v565 = vsel %vm560, %v562, %v564
        %566 = vrot.lane.b32.xlu0 %v563, 32
        %v567 = vpop.permute.xlu0 %566
        %568 = vrot.lane.b32.xlu0 %v565, 32
        %v569 = vpop.permute.xlu0 %568
        %vm572 = vcmask 1045504
        %v573 = vrot.slane %v556, 2
        %v574 = vrot.slane %v552, 2
        %v575 = vsel %vm572, %v573, %v574
        %v576 = vrot.slane %v557, 2
        %v577 = vsel %vm572, %v574, %v576
        %578 = vrot.lane.b32.xlu0 %v575, 64
        %v579 = vpop.permute.xlu0 %578
        %580 = vrot.lane.b32.xlu0 %v577, 64
        %v581 = vpop.permute.xlu0 %580
        %vm584 = vcmask 1044480
        %v585 = vrot.slane %v556, 3
        %v586 = vrot.slane %v552, 3
        %v587 = vsel %vm584, %v585, %v586
        %v588 = vrot.slane %v557, 3
        %v589 = vsel %vm584, %v586, %v588
        %590 = vrot.lane.b32.xlu0 %v587, 96
        %v591 = vpop.permute.xlu0 %590
        %592 = vrot.lane.b32.xlu0 %v589, 96
        %v593 = vpop.permute.xlu0 %592
        %vm596 = vcmask 1043456
        %v597 = vrot.slane %v556, 4
        %v598 = vrot.slane %v552, 4
        %v599 = vsel %vm596, %v597, %v598
        %v600 = vrot.slane %v557, 4
        %v601 = vsel %vm596, %v598, %v600
        %vm602 = vcmask 261120
        %v603 = vsel %vm602, %v556, %v567
        %v604 = vsel %vm602, %v552, %v569
        %vm605 = vcmask 523264
        %v606 = vsel %vm605, %v603, %v579
        %v607 = vsel %vm605, %v604, %v581
        %vm608 = vcmask 785408
        %v609 = vsel %vm608, %v606, %v591
        %v610 = vsel %vm608, %v607, %v593
        %v611 = vld [vmem:[#allocation7] sm:$0xff]
        %v612 = vld [vmem:[#allocation7 + $0x8] sm:$0xff]
        %v613 = vld [vmem:[#allocation7 + $0x10] sm:$0xff]
        %v614 = vld [vmem:[#allocation7 + $0x18] sm:$0xff]
        %v615 = vld [vmem:[#allocation7 + $0x20] sm:$0xff]
        %v616 = vld [vmem:[#allocation7 + $0x28] sm:$0xff]
        %v617 = vld [vmem:[#allocation7 + $0x30] sm:$0xff]
        %v618 = vld [vmem:[#allocation7 + $0x38] sm:$0xff]
        %v619 = vld [vmem:[#allocation7 + $0x40] sm:$0xff]
        %v620 = vld [vmem:[#allocation7 + $0x48] sm:$0xff]
        %v621 = vld [vmem:[#allocation7 + $0x50] sm:$0xff]
        %v622 = vld [vmem:[#allocation7 + $0x58] sm:$0xff]
        %v623 = vld [vmem:[#allocation7 + $0x60] sm:$0xff]
        %v624 = vld [vmem:[#allocation7 + $0x68] sm:$0xff]
        %v625 = vld [vmem:[#allocation7 + $0x70] sm:$0xff]
        %v626 = vld [vmem:[#allocation7 + $0x78] sm:$0xff]
        %v627 = vld [vmem:[#allocation7 + $0x80] sm:$0xff]
        %v628 = vld [vmem:[#allocation7 + $0x88] sm:$0xff]
        %v629 = vld [vmem:[#allocation7 + $0x90] sm:$0xff]
        %v630 = vld [vmem:[#allocation7 + $0x98] sm:$0xff]
        %v631 = vsel %vm602, %v599, 0
        %v633 = vsel %vm602, %v601, 0
        %635 = vmatprep.subr.mxu0 0.0
        %636 = vmatpush1.msra.mxu0 %v611
        %637 = vmatprep.subr.mxu0 0.0
        %638 = vmatpush1.msra.mxu0 %v612
        %639 = vmatprep.subr.mxu0 0.0
        %640 = vmatpush1.msra.mxu0 %v613
        %641 = vmatprep.subr.mxu0 0.0
        %642 = vmatpush1.msra.mxu0 %v614
        %643 = vmatprep.subr.mxu0 0.0
        %644 = vmatpush1.msra.mxu0 %v615
        %645 = vmatprep.subr.mxu0 0.0
        %646 = vmatpush1.msra.mxu0 %v616
        %647 = vmatprep.subr.mxu0 0.0
        %648 = vmatpush1.msra.mxu0 %v617
        %649 = vmatprep.subr.mxu0 0.0
        %650 = vmatpush1.msra.mxu0 %v618
        %651 = vmatprep.subr.mxu0 0.0
        %652 = vmatpush1.msra.mxu0 %v619
        %653 = vmatprep.subr.mxu0 0.0
        %654 = vmatpush1.msra.mxu0 %v620
        %655 = vmatprep.subr.mxu0 0.0
        %656 = vmatpush1.msra.mxu0 %v621
        %657 = vmatprep.subr.mxu0 0.0
        %658 = vmatpush1.msra.mxu0 %v622
        %659 = vmatprep.subr.mxu0 0.0
        %660 = vmatpush1.msra.mxu0 %v623
        %661 = vmatprep.subr.mxu0 0.0
        %662 = vmatpush1.msra.mxu0 %v624
        %663 = vmatprep.subr.mxu0 0.0
        %664 = vmatpush1.msra.mxu0 %v625
        %665 = vmatprep.subr.mxu0 0.0
        %666 = vmatpush1.msra.mxu0 %v626
        %667 = vmatprep.subr.mxu0 0.0
        %668 = vmatpush1.msra.mxu0 %v627
        %669 = vmatprep.subr.mxu0 0.0
        %670 = vmatpush1.msra.mxu0 %v628
        %671 = vmatprep.subr.mxu0 0.0
        %672 = vmatpush1.msra.mxu0 %v629
        %673 = vmatprep.subr.mxu0 0.0
        %674 = vmatpush1.msra.mxu0 %v630
        %675 = vmatprep.subr.mxu0 0.0
        %676 = vmatpush1.msra.mxu0 0.0
        %677 = vmatprep.subr.mxu0 0.0
        %678 = vmatpush1.msra.mxu0 0.0
        %679 = vmatprep.subr.mxu0 0.0
        %680 = vmatpush1.msra.mxu0 0.0
        %681 = vmatprep.subr.mxu0 0.0
        %682 = vmatpush1.msra.mxu0 0.0
        %683 = vmatprep.subr.mxu0 0.0
        %684 = vmatpush1.msra.mxu0 0.0
        %685 = vmatprep.subr.mxu0 0.0
        %686 = vmatpush1.msra.mxu0 0.0
        %687 = vmatprep.subr.mxu0 0.0
        %688 = vmatpush1.msra.mxu0 0.0
        %689 = vmatprep.subr.mxu0 0.0
        %690 = vmatpush1.msra.mxu0 0.0
        %691 = vmatprep.subr.mxu0 0.0
        %692 = vmatpush1.msra.mxu0 0.0
        %693 = vmatprep.subr.mxu0 0.0
        %694 = vmatpush1.msra.mxu0 0.0
        %695 = vmatprep.subr.mxu0 0.0
        %696 = vmatpush1.msra.mxu0 0.0
        %697 = vmatprep.subr.mxu0 0.0
        %698 = vmatpush1.msra.mxu0 0.0
        %699 = vmatprep.mubr.f32.mxu0 %v631
        %700 = vmatmul.mubr.f32.gmra.mrb[0].mxu0 %v609
        %v701 = vpop.f32.mrb[0].mxu0
        %v702 = vadd.f32 0.0, %v701
        %v703 = vpop.f32.mrb[0].mxu0
        %704 = vmatprep.mubr.f32.mxu0 %v633
        %705 = vmatmul.mubr.f32.gmra.mrb[0].mxu0 %v610
        %v706 = vpop.f32.mrb[0].mxu0
        %v707 = vadd.f32 0.0, %v706
        %v708 = vpop.f32.mrb[0].mxu0
        %709 = vdwg.mxu0
        %v710 = vld [vmem:[%s5] sm:$0x1]
        %v712 = vlaneseq
        %v713 = vshrl.u32 %v712, 7
        %v714 = vsub.s32 0, %v713
        %v715 = vrot.slane %v710, %v714
        %v717 = vmul.f32 %v702, %v715
        %v718 = vmul.f32 %v707, %v715
        %v719 = vld [vmem:[%s6] sm:$0x1]
        %v721 = vlaneseq
        %v722 = vshrl.u32 %v721, 7
        %v723 = vsub.s32 0, %v722
        %v724 = vrot.slane %v719, %v723
        %v726 = vadd.f32 %v717, %v724
        %v727 = vadd.f32 %v718, %v724
        %v728 = vmax.f32 %v726, 0.0
        %v729 = vmax.f32 %v727, 0.0
        %v732 = vrot.slane %v728, 6
        %v733 = vrot.slane %v729, 6
        %v734 = vsel %vm549, %v732, %v733
        %v738 = vsel %vm549, 0.0, %v732
        %v739 = vsel %vm549, %v733, 0.0
        %740 = vrot.lane.b32.xlu0 %v556, 96
        %v741 = vpop.permute.xlu0 %740
        %742 = vrot.lane.b32.xlu0 %v552, 96
        %v743 = vpop.permute.xlu0 %742
        %744 = vrot.lane.b32.xlu0 %v557, 96
        %v745 = vpop.permute.xlu0 %744
        %v749 = vadd.f32 %v738, %v741
        %v750 = vadd.f32 %v734, %v743
        %v751 = vadd.f32 %v739, %v745
        %v755 = vrot.slane %v749, 1
        %v756 = vrot.slane %v750, 1
        %v757 = vsel %vm560, %v755, %v756
        %v758 = vrot.slane %v751, 1
        %v759 = vsel %vm560, %v756, %v758
        %760 = vrot.lane.b32.xlu0 %v757, 32
        %v761 = vpop.permute.xlu0 %760
        %762 = vrot.lane.b32.xlu0 %v759, 32
        %v763 = vpop.permute.xlu0 %762
        %v766 = vrot.slane %v749, 2
        %v767 = vrot.slane %v750, 2
        %v768 = vsel %vm572, %v766, %v767
        %v769 = vrot.slane %v751, 2
        %v770 = vsel %vm572, %v767, %v769
        %771 = vrot.lane.b32.xlu0 %v768, 64
        %v772 = vpop.permute.xlu0 %771
        %773 = vrot.lane.b32.xlu0 %v770, 64
        %v774 = vpop.permute.xlu0 %773
        %v777 = vrot.slane %v749, 3
        %v778 = vrot.slane %v750, 3
        %v779 = vsel %vm584, %v777, %v778
        %v780 = vrot.slane %v751, 3
        %v781 = vsel %vm584, %v778, %v780
        %782 = vrot.lane.b32.xlu0 %v779, 96
        %v783 = vpop.permute.xlu0 %782
        %784 = vrot.lane.b32.xlu0 %v781, 96
        %v785 = vpop.permute.xlu0 %784
        %v788 = vrot.slane %v749, 4
        %v789 = vrot.slane %v750, 4
        %v790 = vsel %vm596, %v788, %v789
        %v791 = vrot.slane %v751, 4
        %v792 = vsel %vm596, %v789, %v791
        %v793 = vsel %vm602, %v749, %v761
        %v794 = vsel %vm602, %v750, %v763
        %v795 = vsel %vm605, %v793, %v772
        %v796 = vsel %vm605, %v794, %v774
        %v797 = vsel %vm608, %v795, %v783
        %v798 = vsel %vm608, %v796, %v785
        %s799 = scalar_lea.vmem [#allocation7], 160
        %v800 = vld [vmem:[%s799] sm:$0xff]
        %v801 = vld [vmem:[%s799 + $0x8] sm:$0xff]
        %v802 = vld [vmem:[%s799 + $0x10] sm:$0xff]
        %v803 = vld [vmem:[%s799 + $0x18] sm:$0xff]
        %v804 = vld [vmem:[%s799 + $0x20] sm:$0xff]
        %v805 = vld [vmem:[%s799 + $0x28] sm:$0xff]
        %v806 = vld [vmem:[%s799 + $0x30] sm:$0xff]
        %v807 = vld [vmem:[%s799 + $0x38] sm:$0xff]
        %v808 = vld [vmem:[%s799 + $0x40] sm:$0xff]
        %v809 = vld [vmem:[%s799 + $0x48] sm:$0xff]
        %v810 = vld [vmem:[%s799 + $0x50] sm:$0xff]
        %v811 = vld [vmem:[%s799 + $0x58] sm:$0xff]
        %v812 = vld [vmem:[%s799 + $0x60] sm:$0xff]
        %v813 = vld [vmem:[%s799 + $0x68] sm:$0xff]
        %v814 = vld [vmem:[%s799 + $0x70] sm:$0xff]
        %v815 = vld [vmem:[%s799 + $0x78] sm:$0xff]
        %v816 = vld [vmem:[%s799 + $0x80] sm:$0xff]
        %v817 = vld [vmem:[%s799 + $0x88] sm:$0xff]
        %v818 = vld [vmem:[%s799 + $0x90] sm:$0xff]
        %v819 = vld [vmem:[%s799 + $0x98] sm:$0xff]
        %v820 = vsel %vm602, %v790, 0
        %v822 = vsel %vm602, %v792, 0
        %824 = vmatprep.subr.mxu0 0.0
        %825 = vmatpush1.msra.mxu0 %v800
        %826 = vmatprep.subr.mxu0 0.0
        %827 = vmatpush1.msra.mxu0 %v801
        %828 = vmatprep.subr.mxu0 0.0
        %829 = vmatpush1.msra.mxu0 %v802
        %830 = vmatprep.subr.mxu0 0.0
        %831 = vmatpush1.msra.mxu0 %v803
        %832 = vmatprep.subr.mxu0 0.0
        %833 = vmatpush1.msra.mxu0 %v804
        %834 = vmatprep.subr.mxu0 0.0
        %835 = vmatpush1.msra.mxu0 %v805
        %836 = vmatprep.subr.mxu0 0.0
        %837 = vmatpush1.msra.mxu0 %v806
        %838 = vmatprep.subr.mxu0 0.0
        %839 = vmatpush1.msra.mxu0 %v807
        %840 = vmatprep.subr.mxu0 0.0
        %841 = vmatpush1.msra.mxu0 %v808
        %842 = vmatprep.subr.mxu0 0.0
        %843 = vmatpush1.msra.mxu0 %v809
        %844 = vmatprep.subr.mxu0 0.0
        %845 = vmatpush1.msra.mxu0 %v810
        %846 = vmatprep.subr.mxu0 0.0
        %847 = vmatpush1.msra.mxu0 %v811
        %848 = vmatprep.subr.mxu0 0.0
        %849 = vmatpush1.msra.mxu0 %v812
        %850 = vmatprep.subr.mxu0 0.0
        %851 = vmatpush1.msra.mxu0 %v813
        %852 = vmatprep.subr.mxu0 0.0
        %853 = vmatpush1.msra.mxu0 %v814
        %854 = vmatprep.subr.mxu0 0.0
        %855 = vmatpush1.msra.mxu0 %v815
        %856 = vmatprep.subr.mxu0 0.0
        %857 = vmatpush1.msra.mxu0 %v816
        %858 = vmatprep.subr.mxu0 0.0
        %859 = vmatpush1.msra.mxu0 %v817
        %860 = vmatprep.subr.mxu0 0.0
        %861 = vmatpush1.msra.mxu0 %v818
        %862 = vmatprep.subr.mxu0 0.0
        %863 = vmatpush1.msra.mxu0 %v819
        %864 = vmatprep.subr.mxu0 0.0
        %865 = vmatpush1.msra.mxu0 0.0
        %866 = vmatprep.subr.mxu0 0.0
        %867 = vmatpush1.msra.mxu0 0.0
        %868 = vmatprep.subr.mxu0 0.0
        %869 = vmatpush1.msra.mxu0 0.0
        %870 = vmatprep.subr.mxu0 0.0
        %871 = vmatpush1.msra.mxu0 0.0
        %872 = vmatprep.subr.mxu0 0.0
        %873 = vmatpush1.msra.mxu0 0.0
        %874 = vmatprep.subr.mxu0 0.0
        %875 = vmatpush1.msra.mxu0 0.0
        %876 = vmatprep.subr.mxu0 0.0
        %877 = vmatpush1.msra.mxu0 0.0
        %878 = vmatprep.subr.mxu0 0.0
        %879 = vmatpush1.msra.mxu0 0.0
        %880 = vmatprep.subr.mxu0 0.0
        %881 = vmatpush1.msra.mxu0 0.0
        %882 = vmatprep.subr.mxu0 0.0
        %883 = vmatpush1.msra.mxu0 0.0
        %884 = vmatprep.subr.mxu0 0.0
        %885 = vmatpush1.msra.mxu0 0.0
        %886 = vmatprep.subr.mxu0 0.0
        %887 = vmatpush1.msra.mxu0 0.0
        %888 = vmatprep.mubr.f32.mxu0 %v820
        %889 = vmatmul.mubr.f32.gmra.mrb[0].mxu0 %v797
        %v890 = vpop.f32.mrb[0].mxu0
        %v891 = vadd.f32 0.0, %v890
        %v892 = vpop.f32.mrb[0].mxu0
        %893 = vmatprep.mubr.f32.mxu0 %v822
        %894 = vmatmul.mubr.f32.gmra.mrb[0].mxu0 %v798
        %v895 = vpop.f32.mrb[0].mxu0
        %v896 = vadd.f32 0.0, %v895
        %v897 = vpop.f32.mrb[0].mxu0
        %898 = vdwg.mxu0
        %s899 = scalar_lea.vmem %s5, 1
        %v900 = vld [vmem:[%s899] sm:$0x1]
        %v902 = vlaneseq
        %v903 = vshrl.u32 %v902, 7
        %v904 = vsub.s32 0, %v903
        %v905 = vrot.slane %v900, %v904
        %v907 = vmul.f32 %v891, %v905
        %v908 = vmul.f32 %v896, %v905
        %s909 = scalar_lea.vmem %s6, 1
        %v910 = vld [vmem:[%s909] sm:$0x1]
        %v912 = vlaneseq
        %v913 = vshrl.u32 %v912, 7
        %v914 = vsub.s32 0, %v913
        %v915 = vrot.slane %v910, %v914
        %v917 = vadd.f32 %v907, %v915
        %v918 = vadd.f32 %v908, %v915
        %v919 = vmax.f32 %v917, 0.0
        %v920 = vmax.f32 %v918, 0.0
        %v923 = vrot.slane %v919, 6
        %v924 = vrot.slane %v920, 6
        %v925 = vsel %vm549, %v923, %v924
        %v929 = vsel %vm549, 0.0, %v923
        %v930 = vsel %vm549, %v924, 0.0
        %931 = vrot.lane.b32.xlu0 %v556, 64
        %v932 = vpop.permute.xlu0 %931
        %933 = vrot.lane.b32.xlu0 %v552, 64
        %v934 = vpop.permute.xlu0 %933
        %935 = vrot.lane.b32.xlu0 %v557, 64
        %v936 = vpop.permute.xlu0 %935
        %v940 = vadd.f32 %v929, %v932
        %v941 = vadd.f32 %v925, %v934
        %v942 = vadd.f32 %v930, %v936
        %v946 = vrot.slane %v940, 1
        %v947 = vrot.slane %v941, 1
        %v948 = vsel %vm560, %v946, %v947
        %v949 = vrot.slane %v942, 1
        %v950 = vsel %vm560, %v947, %v949
        %951 = vrot.lane.b32.xlu0 %v948, 32
        %v952 = vpop.permute.xlu0 %951
        %953 = vrot.lane.b32.xlu0 %v950, 32
        %v954 = vpop.permute.xlu0 %953
        %v957 = vrot.slane %v940, 2
        %v958 = vrot.slane %v941, 2
        %v959 = vsel %vm572, %v957, %v958
        %v960 = vrot.slane %v942, 2
        %v961 = vsel %vm572, %v958, %v960
        %962 = vrot.lane.b32.xlu0 %v959, 64
        %v963 = vpop.permute.xlu0 %962
        %964 = vrot.lane.b32.xlu0 %v961, 64
        %v965 = vpop.permute.xlu0 %964
        %v968 = vrot.slane %v940, 3
        %v969 = vrot.slane %v941, 3
        %v970 = vsel %vm584, %v968, %v969
        %v971 = vrot.slane %v942, 3
        %v972 = vsel %vm584, %v969, %v971
        %973 = vrot.lane.b32.xlu0 %v970, 96
        %v974 = vpop.permute.xlu0 %973
        %975 = vrot.lane.b32.xlu0 %v972, 96
        %v976 = vpop.permute.xlu0 %975
        %v979 = vrot.slane %v940, 4
        %v980 = vrot.slane %v941, 4
        %v981 = vsel %vm596, %v979, %v980
        %v982 = vrot.slane %v942, 4
        %v983 = vsel %vm596, %v980, %v982
        %v984 = vsel %vm602, %v940, %v952
        %v985 = vsel %vm602, %v941, %v954
        %v986 = vsel %vm605, %v984, %v963
        %v987 = vsel %vm605, %v985, %v965
        %v988 = vsel %vm608, %v986, %v974
        %v989 = vsel %vm608, %v987, %v976
        %s990 = scalar_lea.vmem [#allocation7], 320
        %v991 = vld [vmem:[%s990] sm:$0xff]
        %v992 = vld [vmem:[%s990 + $0x8] sm:$0xff]
        %v993 = vld [vmem:[%s990 + $0x10] sm:$0xff]
        %v994 = vld [vmem:[%s990 + $0x18] sm:$0xff]
        %v995 = vld [vmem:[%s990 + $0x20] sm:$0xff]
        %v996 = vld [vmem:[%s990 + $0x28] sm:$0xff]
        %v997 = vld [vmem:[%s990 + $0x30] sm:$0xff]
        %v998 = vld [vmem:[%s990 + $0x38] sm:$0xff]
        %v999 = vld [vmem:[%s990 + $0x40] sm:$0xff]
        %v1000 = vld [vmem:[%s990 + $0x48] sm:$0xff]
        %v1001 = vld [vmem:[%s990 + $0x50] sm:$0xff]
        %v1002 = vld [vmem:[%s990 + $0x58] sm:$0xff]
        %v1003 = vld [vmem:[%s990 + $0x60] sm:$0xff]
        %v1004 = vld [vmem:[%s990 + $0x68] sm:$0xff]
        %v1005 = vld [vmem:[%s990 + $0x70] sm:$0xff]
        %v1006 = vld [vmem:[%s990 + $0x78] sm:$0xff]
        %v1007 = vld [vmem:[%s990 + $0x80] sm:$0xff]
        %v1008 = vld [vmem:[%s990 + $0x88] sm:$0xff]
        %v1009 = vld [vmem:[%s990 + $0x90] sm:$0xff]
        %v1010 = vld [vmem:[%s990 + $0x98] sm:$0xff]
        %v1011 = vsel %vm602, %v981, 0
        %v1013 = vsel %vm602, %v983, 0
        %1015 = vmatprep.subr.mxu0 0.0
        %1016 = vmatpush1.msra.mxu0 %v991
        %1017 = vmatprep.subr.mxu0 0.0
        %1018 = vmatpush1.msra.mxu0 %v992
        %1019 = vmatprep.subr.mxu0 0.0
        %1020 = vmatpush1.msra.mxu0 %v993
        %1021 = vmatprep.subr.mxu0 0.0
        %1022 = vmatpush1.msra.mxu0 %v994
        %1023 = vmatprep.subr.mxu0 0.0
        %1024 = vmatpush1.msra.mxu0 %v995
        %1025 = vmatprep.subr.mxu0 0.0
        %1026 = vmatpush1.msra.mxu0 %v996
        %1027 = vmatprep.subr.mxu0 0.0
        %1028 = vmatpush1.msra.mxu0 %v997
        %1029 = vmatprep.subr.mxu0 0.0
        %1030 = vmatpush1.msra.mxu0 %v998
        %1031 = vmatprep.subr.mxu0 0.0
        %1032 = vmatpush1.msra.mxu0 %v999
        %1033 = vmatprep.subr.mxu0 0.0
        %1034 = vmatpush1.msra.mxu0 %v1000
        %1035 = vmatprep.subr.mxu0 0.0
        %1036 = vmatpush1.msra.mxu0 %v1001
        %1037 = vmatprep.subr.mxu0 0.0
        %1038 = vmatpush1.msra.mxu0 %v1002
        %1039 = vmatprep.subr.mxu0 0.0
        %1040 = vmatpush1.msra.mxu0 %v1003
        %1041 = vmatprep.subr.mxu0 0.0
        %1042 = vmatpush1.msra.mxu0 %v1004
        %1043 = vmatprep.subr.mxu0 0.0
        %1044 = vmatpush1.msra.mxu0 %v1005
        %1045 = vmatprep.subr.mxu0 0.0
        %1046 = vmatpush1.msra.mxu0 %v1006
        %1047 = vmatprep.subr.mxu0 0.0
        %1048 = vmatpush1.msra.mxu0 %v1007
        %1049 = vmatprep.subr.mxu0 0.0
        %1050 = vmatpush1.msra.mxu0 %v1008
        %1051 = vmatprep.subr.mxu0 0.0
        %1052 = vmatpush1.msra.mxu0 %v1009
        %1053 = vmatprep.subr.mxu0 0.0
        %1054 = vmatpush1.msra.mxu0 %v1010
        %1055 = vmatprep.subr.mxu0 0.0
        %1056 = vmatpush1.msra.mxu0 0.0
        %1057 = vmatprep.subr.mxu0 0.0
        %1058 = vmatpush1.msra.mxu0 0.0
        %1059 = vmatprep.subr.mxu0 0.0
        %1060 = vmatpush1.msra.mxu0 0.0
        %1061 = vmatprep.subr.mxu0 0.0
        %1062 = vmatpush1.msra.mxu0 0.0
        %1063 = vmatprep.subr.mxu0 0.0
        %1064 = vmatpush1.msra.mxu0 0.0
        %1065 = vmatprep.subr.mxu0 0.0
        %1066 = vmatpush1.msra.mxu0 0.0
        %1067 = vmatprep.subr.mxu0 0.0
        %1068 = vmatpush1.msra.mxu0 0.0
        %1069 = vmatprep.subr.mxu0 0.0
        %1070 = vmatpush1.msra.mxu0 0.0
        %1071 = vmatprep.subr.mxu0 0.0
        %1072 = vmatpush1.msra.mxu0 0.0
        %1073 = vmatprep.subr.mxu0 0.0
        %1074 = vmatpush1.msra.mxu0 0.0
        %1075 = vmatprep.subr.mxu0 0.0
        %1076 = vmatpush1.msra.mxu0 0.0
        %1077 = vmatprep.subr.mxu0 0.0
        %1078 = vmatpush1.msra.mxu0 0.0
        %1079 = vmatprep.mubr.f32.mxu0 %v1011
        %1080 = vmatmul.mubr.f32.gmra.mrb[0].mxu0 %v988
        %v1081 = vpop.f32.mrb[0].mxu0
        %v1082 = vadd.f32 0.0, %v1081
        %v1083 = vpop.f32.mrb[0].mxu0
        %1084 = vmatprep.mubr.f32.mxu0 %v1013
        %1085 = vmatmul.mubr.f32.gmra.mrb[0].mxu0 %v989
        %v1086 = vpop.f32.mrb[0].mxu0
        %v1087 = vadd.f32 0.0, %v1086
        %v1088 = vpop.f32.mrb[0].mxu0
        %1089 = vdwg.mxu0
        %s1090 = scalar_lea.vmem %s5, 2
        %v1091 = vld [vmem:[%s1090] sm:$0x1]
        %v1093 = vlaneseq
        %v1094 = vshrl.u32 %v1093, 7
        %v1095 = vsub.s32 0, %v1094
        %v1096 = vrot.slane %v1091, %v1095
        %v1098 = vmul.f32 %v1082, %v1096
        %v1099 = vmul.f32 %v1087, %v1096
        %s1100 = scalar_lea.vmem %s6, 2
        %v1101 = vld [vmem:[%s1100] sm:$0x1]
        %v1103 = vlaneseq
        %v1104 = vshrl.u32 %v1103, 7
        %v1105 = vsub.s32 0, %v1104
        %v1106 = vrot.slane %v1101, %v1105
        %v1108 = vadd.f32 %v1098, %v1106
        %v1109 = vadd.f32 %v1099, %v1106
        %v1110 = vmax.f32 %v1108, 0.0
        %v1111 = vmax.f32 %v1109, 0.0
        %1112 = vrot.lane.b32.xlu0 %v919, 32
        %v1113 = vpop.permute.xlu0 %1112
        %1114 = vrot.lane.b32.xlu0 %v920, 32
        %v1115 = vpop.permute.xlu0 %1114
        %1120 = vrot.lane.b32.xlu0 %v1110, 64
        %v1121 = vpop.permute.xlu0 %1120
        %1122 = vrot.lane.b32.xlu0 %v1111, 64
        %v1123 = vpop.permute.xlu0 %1122
        %v1126 = vsel %vm602, %v728, %v1113
        %v1127 = vsel %vm602, %v729, %v1115
        %v1128 = vsel %vm605, %v1126, %v1121
        %v1129 = vsel %vm605, %v1127, %v1123
        %v1130 = vsel %vm608, %v1128, %v545
        %v1131 = vsel %vm608, %v1129, %v546
        %v1132 = vld [vmem:[#allocation8] sm:$0xff]
        %v1133 = vld [vmem:[#allocation8 + $0x8] sm:$0xff]
        %v1134 = vld [vmem:[#allocation8 + $0x10] sm:$0xff]
        %v1135 = vld [vmem:[#allocation8 + $0x18] sm:$0xff]
        %v1136 = vld [vmem:[#allocation8 + $0x20] sm:$0xff]
        %v1137 = vld [vmem:[#allocation8 + $0x28] sm:$0xff]
        %v1138 = vld [vmem:[#allocation8 + $0x30] sm:$0xff]
        %v1139 = vld [vmem:[#allocation8 + $0x38] sm:$0xff]
        %v1140 = vld [vmem:[#allocation8 + $0x40] sm:$0xff]
        %v1141 = vld [vmem:[#allocation8 + $0x48] sm:$0xff]
        %v1142 = vld [vmem:[#allocation8 + $0x50] sm:$0xff]
        %v1143 = vld [vmem:[#allocation8 + $0x58] sm:$0xff]
        %v1144 = vld [vmem:[#allocation8 + $0x60] sm:$0xff]
        %v1145 = vld [vmem:[#allocation8 + $0x68] sm:$0xff]
        %v1146 = vld [vmem:[#allocation8 + $0x70] sm:$0xff]
        %v1147 = vld [vmem:[#allocation8 + $0x78] sm:$0xff]
        %1148 = vmatprep.subr.mxu0 0.0
        %1149 = vmatpush1.msra.mxu0 %v1132
        %1150 = vmatprep.subr.mxu0 0.0
        %1151 = vmatpush1.msra.mxu0 %v1133
        %1152 = vmatprep.subr.mxu0 0.0
        %1153 = vmatpush1.msra.mxu0 %v1134
        %1154 = vmatprep.subr.mxu0 0.0
        %1155 = vmatpush1.msra.mxu0 %v1135
        %1156 = vmatprep.subr.mxu0 0.0
        %1157 = vmatpush1.msra.mxu0 %v1136
        %1158 = vmatprep.subr.mxu0 0.0
        %1159 = vmatpush1.msra.mxu0 %v1137
        %1160 = vmatprep.subr.mxu0 0.0
        %1161 = vmatpush1.msra.mxu0 %v1138
        %1162 = vmatprep.subr.mxu0 0.0
        %1163 = vmatpush1.msra.mxu0 %v1139
        %1164 = vmatprep.subr.mxu0 0.0
        %1165 = vmatpush1.msra.mxu0 %v1140
        %1166 = vmatprep.subr.mxu0 0.0
        %1167 = vmatpush1.msra.mxu0 %v1141
        %1168 = vmatprep.subr.mxu0 0.0
        %1169 = vmatpush1.msra.mxu0 %v1142
        %1170 = vmatprep.subr.mxu0 0.0
        %1171 = vmatpush1.msra.mxu0 %v1143
        %1172 = vmatprep.subr.mxu0 0.0
        %1173 = vmatpush1.msra.mxu0 %v1144
        %1174 = vmatprep.subr.mxu0 0.0
        %1175 = vmatpush1.msra.mxu0 %v1145
        %1176 = vmatprep.subr.mxu0 0.0
        %1177 = vmatpush1.msra.mxu0 %v1146
        %1178 = vmatprep.subr.mxu0 0.0
        %1179 = vmatpush1.msra.mxu0 %v1147
        %1180 = vmatprep.subr.mxu0 0.0
        %1181 = vmatpush1.msra.mxu0 0.0
        %1182 = vmatprep.subr.mxu0 0.0
        %1183 = vmatpush1.msra.mxu0 0.0
        %1184 = vmatprep.subr.mxu0 0.0
        %1185 = vmatpush1.msra.mxu0 0.0
        %1186 = vmatprep.subr.mxu0 0.0
        %1187 = vmatpush1.msra.mxu0 0.0
        %1188 = vmatprep.subr.mxu0 0.0
        %1189 = vmatpush1.msra.mxu0 0.0
        %1190 = vmatprep.subr.mxu0 0.0
        %1191 = vmatpush1.msra.mxu0 0.0
        %1192 = vmatprep.subr.mxu0 0.0
        %1193 = vmatpush1.msra.mxu0 0.0
        %1194 = vmatprep.subr.mxu0 0.0
        %1195 = vmatpush1.msra.mxu0 0.0
        %1196 = vmatprep.subr.mxu0 0.0
        %1197 = vmatpush1.msra.mxu0 0.0
        %1198 = vmatprep.subr.mxu0 0.0
        %1199 = vmatpush1.msra.mxu0 0.0
        %1200 = vmatprep.subr.mxu0 0.0
        %1201 = vmatpush1.msra.mxu0 0.0
        %1202 = vmatprep.subr.mxu0 0.0
        %1203 = vmatpush1.msra.mxu0 0.0
        %1204 = vmatprep.subr.mxu0 0.0
        %1205 = vmatpush1.msra.mxu0 0.0
        %1206 = vmatprep.subr.mxu0 0.0
        %1207 = vmatpush1.msra.mxu0 0.0
        %1208 = vmatprep.subr.mxu0 0.0
        %1209 = vmatpush1.msra.mxu0 0.0
        %1210 = vmatprep.subr.mxu0 0.0
        %1211 = vmatpush1.msra.mxu0 0.0
        %1212 = vmatprep.mubr.f32.mxu0 0.0
        %1213 = vmatmul.mubr.f32.gmra.mrb[0].mxu0 %v1130
        %v1214 = vpop.f32.mrb[0].mxu0
        %v1215 = vadd.f32 0.0, %v1214
        %v1216 = vpop.f32.mrb[0].mxu0
        %1217 = vmatprep.mubr.f32.mxu0 0.0
        %1218 = vmatmul.mubr.f32.gmra.mrb[0].mxu0 %v1131
        %v1219 = vpop.f32.mrb[0].mxu0
        %v1220 = vadd.f32 0.0, %v1219
        %v1221 = vpop.f32.mrb[0].mxu0
        %1222 = vdwg.mxu0
        %v1223 = vld [vmem:[%s8] sm:$0x1]
        %v1225 = vlaneseq
        %v1226 = vshrl.u32 %v1225, 7
        %v1227 = vsub.s32 0, %v1226
        %v1228 = vrot.slane %v1223, %v1227
        %v1230 = vmul.f32 %v1215, %v1228
        %v1231 = vmul.f32 %v1220, %v1228
        %v1232 = vld [vmem:[#allocation10] sm:$0x1]
        %v1234 = vlaneseq
        %v1235 = vshrl.u32 %v1234, 7
        %v1236 = vsub.s32 0, %v1235
        %v1237 = vrot.slane %v1232, %v1236
        %v1239 = vadd.f32 %v1230, %v1237
        %v1240 = vadd.f32 %v1231, %v1237
        %v1241 = vadd.f32 %v1239, %v434
        %v1242 = vadd.f32 %v1240, %v435
        %v1243 = vmax.f32 %v1241, 0.0
        %v1244 = vmax.f32 %v1242, 0.0
        %1245 = vst [vmem:[%s433] sm:$0xff] %v1243
        %1246 = vst [vmem:[%s433 + $0x8] sm:$0xff] %v1244
        %s1247 = sand.u32 %s252, 1
        %s1248 = scalar_lea.sflag [#allocation4], %s1247
        %s1249 = sand.u32 %s252, 1
        %s1250 = smul.addr %s1249, 16
        %s1251 = scalar_lea.vmem [#allocation11], %s1250
        // Predicated region
        $region81: #{bottle2neck_forward.1} parent=59 // pred_check
          %p1252 = pneg %p262
        $region82: #{bottle2neck_forward.1} parent=59 // pred_check_branch
          %1254 = sbr.rel (%p1252) target = $region84
        $region83: #{bottle2neck_forward.1} parent=59 // pred_region
          %s1256 = ssub.s32 256, 256
          %1257 = vsyncadd %s1248, %s1256
          %s1258 = smul.addr %s29, 2
          %s1259 = smul.addr %s1258, 128
          %s1260 = scalar_lea.hbm %s10, %s1259
          %s1261 = sshll.u32 %s1251, 4
          %s1262 = int_to_ptr.vmem [resolvable:$true] %s1261
          %1267 = dma.vmem_to_hbm [thread:$0]  %s1262, 256, %s1260, %s1248, 128, 128, 8
        $region84: #{bottle2neck_forward.1} parent=59 // pred_fallthru
          _
      $region60: #{bottle2neck_forward.1} parent=5 // pred_fallthru
        _
      %p1268 = scmp.le.s32.totalorder 2, %s24
      // Predicated region
      $region85: #{bottle2neck_forward.1} parent=5 // pred_check
        %p1269 = pneg %p1268
      $region86: #{bottle2neck_forward.1} parent=5 // pred_check_branch
        %1271 = sbr.rel (%p1269) target = $region88
      $region87: #{bottle2neck_forward.1} parent=5 // pred_region
        %s1272 = ssub.s32 %s24, 2
        // Predicated region
        $region89: #{bottle2neck_forward.1} parent=87 // pred_check
          %p1273 = pneg %p268
        $region90: #{bottle2neck_forward.1} parent=87 // pred_check_branch
          %1275 = sbr.rel (%p1273) target = $region92
        $region91: #{bottle2neck_forward.1} parent=87 // pred_region
          %s1276 = sand.u32 %s253, 1
          %s1277 = scalar_lea.sflag [#allocation4], %s1276
          %s1278 = sand.u32 %s253, 1
          %s1279 = smul.addr %s1278, 16
          %s1280 = scalar_lea.vmem [#allocation11], %s1279
          %1281 = dma.done %s1277, 256
        $region92: #{bottle2neck_forward.1} parent=87 // pred_fallthru
          _
      $region88: #{bottle2neck_forward.1} parent=5 // pred_fallthru
        _
    $region6: #{bottle2neck_forward.1} parent=1 // loop_footer
      %s28 = sadd.s32 1, %s24
    $region7: #{bottle2neck_forward.1} parent=1 // loop_footer_branch
      %23 = sbr.rel target = $region3
    $region8: #{bottle2neck_forward.1} parent=1 // loop_exit
      _
    %1282 = vsyncpa [#allocation3], 1
    %s1283 = scalar_lea.sflag [#allocation3], 1
    %1284 = vsyncpa %s1283, 1
    %1285 = vsyncpa [#allocation6], 1
    %1286 = vsyncpa [#allocation9], 1
    %1287 = vsyncpa [#allocation4], 1
    %s1288 = scalar_lea.sflag [#allocation4], 1
    %1289 = vsyncpa %s1288, 1

</llo_original>
